<compile_context>
chip_gen: v5e
topology: v5e:2x2
jax: 0.10.0
libtpu: 0.0.40
codegen_flags: <defaults>
</compile_context>

<pallas_src>
import functools
import math

import jax
import jax.numpy as jnp
from jax.experimental import pallas as pl
from jax.experimental.pallas import tpu as pltpu


# ------------------------------ tiling helpers --------------------------------

def _tile(dim, target, align=8):
    """Largest divisor of `dim` that is <= `target`, preferring `align` multiples.

    Never falls back to the full dimension when dim > target (the old behaviour
    was a silent VMEM cliff on v7x's 64 MiB / v5e's 16 MiB scoped default).
    """
    if dim <= target:
        return dim
    best = None
    for cand in range(target, 0, -1):
        if dim % cand == 0:
            if cand % align == 0:
                return cand
            if best is None:
                best = cand
    return best if best is not None else dim


def _vmem_limit(block_bytes):
    """Scoped-VMEM limit derived from the chosen blocks (2x margin), clamped to
    [32 MiB, 48 MiB]: >= the default scoped limit on every chip, and leaves
    headroom under v7x's 64 MiB physical VMEM."""
    return int(min(max(32 * 1024 * 1024, 2 * block_bytes), 48 * 1024 * 1024))


# ------------------------------ Pallas kernels -------------------------------

def _linear_kernel(x_ref, w_ref, b_ref, o_ref, acc_ref, *, activation):
    # K-accumulation matmul; reduction axis is the last grid axis ("arbitrary").
    @pl.when(pl.program_id(2) == 0)
    def _init():
        acc_ref[...] = jnp.zeros_like(acc_ref)

    acc_ref[...] += jnp.dot(x_ref[...], w_ref[...],
                            preferred_element_type=jnp.float32)

    @pl.when(pl.program_id(2) == pl.num_programs(2) - 1)
    def _finalize():
        y = acc_ref[...] + b_ref[...]
        if activation == "gelu":
            # TODO(synk): HF BERT default is exact erf-GELU; tanh approximation used here.
            c = math.sqrt(2.0 / math.pi)
            y = 0.5 * y * (1.0 + jnp.tanh(c * (y + 0.044715 * y * y * y)))
        elif activation == "tanh":
            y = jnp.tanh(y)
        o_ref[...] = y.astype(o_ref.dtype)


def _ln_core(x, g, b, eps):
    x = x.astype(jnp.float32)
    mu = jnp.mean(x, axis=-1, keepdims=True)
    var = jnp.mean(jnp.square(x - mu), axis=-1, keepdims=True)
    inv = jax.lax.rsqrt(var + eps)
    return (x - mu) * inv * g + b


def _layernorm_kernel(x_ref, g_ref, b_ref, o_ref, *, eps):
    o_ref[...] = _ln_core(x_ref[...], g_ref[...], b_ref[...], eps).astype(o_ref.dtype)


def _residual_layernorm_kernel(x_ref, y_ref, g_ref, b_ref, o_ref, *, eps):
    # Fused residual-add + layernorm (saves a full HBM round trip per call site).
    s = x_ref[...].astype(jnp.float32) + y_ref[...].astype(jnp.float32)
    o_ref[...] = _ln_core(s, g_ref[...], b_ref[...], eps).astype(o_ref.dtype)


def _attn_kernel(qkv_ref, bias_ref, o_ref, *, heads, head_dim, scale):
    # One (batch, head-group) per grid step.  qkv block is (1, S, 3, group_w):
    # lane-aligned slab holding Q/K/V for all heads of this group.
    qkv = qkv_ref[0]                        # (S, 3, group_w) bf16
    bias = bias_ref[0]                      # (1, S) f32 precomputed additive mask
    for h in range(heads):                  # static unrolled; <=2 heads/group on real BERT
        lo = h * head_dim
        # fold 1/sqrt(Dh) into the small (S, Dh) q tile instead of the (S, S) scores
        q = qkv[:, 0, lo:lo + head_dim] * scale
        k = qkv[:, 1, lo:lo + head_dim]
        v = qkv[:, 2, lo:lo + head_dim]
        s = jax.lax.dot_general(q, k, (((1,), (1,)), ((), ())),
                                preferred_element_type=jnp.float32)
        s = s + bias                        # broadcast over query rows
        s = s - jnp.max(s, axis=-1, keepdims=True)
        p = jnp.exp(s)
        p = p * pl.reciprocal(jnp.sum(p, axis=-1, keepdims=True), approx=True)
        ctx = jnp.dot(p.astype(jnp.bfloat16), v, preferred_element_type=jnp.float32)
        # per-head store at a static lane offset inside the dense output block
        # (bounds live ranges; no trailing full-width concatenate)
        o_ref[0, :, lo:lo + head_dim] = ctx.astype(o_ref.dtype)


# ------------------------------ kernel wrappers -------------------------------

def linear(x, w, b, activation=None, out_dtype=jnp.bfloat16, *,
           tm=256, tn=512, tk=1024):
    # x and w are expected to already be bf16 (weights pre-cast once at init);
    # the conditional casts below are no-ops on the steady-state path.
    if x.dtype != jnp.bfloat16:
        x = x.astype(jnp.bfloat16)
    if w.dtype != jnp.bfloat16:
        w = w.astype(jnp.bfloat16)
    M, K = x.shape
    N = w.shape[1]
    # Defaults sized for v6e/v7x (tn multiple of 256 feeds the 2x256x256 MXU);
    # v5e prefers 128-256 tiles (4x128x128 MXU, 16 MiB scoped VMEM default).
    # TODO(synk): per-chip tile sweep; try pipeline_mode=pl.Buffered(3) on the
    # weight spec for FF1/FF2; fp8 weights are a v7x-only option.
    tm, tn, tk = _tile(M, tm, 8), _tile(N, tn, 128), _tile(K, tk, 128)
    grid = (M // tm, N // tn, K // tk)
    blk_bytes = (2 * (tm * tk * 2 + tk * tn * 2 + tn * 4 + tm * tn * out_dtype(0).itemsize)
                 + tm * tn * 4)
    return pl.pallas_call(
        functools.partial(_linear_kernel, activation=activation),
        out_shape=jax.ShapeDtypeStruct((M, N), out_dtype),
        grid=grid,
        in_specs=[pl.BlockSpec((tm, tk), lambda i, j, k: (i, k)),
                  pl.BlockSpec((tk, tn), lambda i, j, k: (k, j)),
                  pl.BlockSpec((1, tn), lambda i, j, k: (0, j))],
        out_specs=pl.BlockSpec((tm, tn), lambda i, j, k: (i, j)),
        scratch_shapes=[pltpu.VMEM((tm, tn), jnp.float32)],
        compiler_params=pltpu.CompilerParams(
            dimension_semantics=("parallel", "parallel", "arbitrary"),
            vmem_limit_bytes=_vmem_limit(blk_bytes)),
    )(x, w, b.reshape(1, N))


def layernorm(x, gamma, beta, eps=1e-12, *, tm=1024):
    M, H = x.shape
    tm = _tile(M, tm, 8)
    blk_bytes = 2 * (tm * H * x.dtype.itemsize + 2 * H * 4 + tm * H * 2)
    return pl.pallas_call(
        functools.partial(_layernorm_kernel, eps=eps),
        out_shape=jax.ShapeDtypeStruct((M, H), jnp.bfloat16),
        grid=(M // tm,),
        in_specs=[pl.BlockSpec((tm, H), lambda i: (i, 0)),
                  pl.BlockSpec((1, H), lambda i: (0, 0)),
                  pl.BlockSpec((1, H), lambda i: (0, 0))],
        out_specs=pl.BlockSpec((tm, H), lambda i: (i, 0)),
        compiler_params=pltpu.CompilerParams(
            dimension_semantics=("parallel",),
            vmem_limit_bytes=_vmem_limit(blk_bytes)),
    )(x, gamma.reshape(1, H), beta.reshape(1, H))


def residual_layernorm(x, y, gamma, beta, eps=1e-12, *, tm=1024):
    M, H = x.shape
    tm = _tile(M, tm, 8)
    blk_bytes = 2 * (2 * tm * H * 2 + 2 * H * 4 + tm * H * 2)
    return pl.pallas_call(
        functools.partial(_residual_layernorm_kernel, eps=eps),
        out_shape=jax.ShapeDtypeStruct((M, H), jnp.bfloat16),
        grid=(M // tm,),
        in_specs=[pl.BlockSpec((tm, H), lambda i: (i, 0)),
                  pl.BlockSpec((tm, H), lambda i: (i, 0)),
                  pl.BlockSpec((1, H), lambda i: (0, 0)),
                  pl.BlockSpec((1, H), lambda i: (0, 0))],
        out_specs=pl.BlockSpec((tm, H), lambda i: (i, 0)),
        compiler_params=pltpu.CompilerParams(
            dimension_semantics=("parallel",),
            vmem_limit_bytes=_vmem_limit(blk_bytes)),
    )(x, y, gamma.reshape(1, H), beta.reshape(1, H))


def attention(qkv, mask_bias, num_heads):
    """qkv: (B, S, 3, H) bf16 (free reshape of the fused QKV projection output);
    mask_bias: (B, 1, S) f32 additive mask."""
    B, S, _, H = qkv.shape
    Dh = H // num_heads
    # Head-group width: a 128-lane head pair when the layout allows it
    # (real BERT: Dh=64 -> group_w=128), otherwise the full hidden dim so the
    # block always satisfies the (8,128)/full-dim tiling rule.
    if H % 128 == 0 and 128 % Dh == 0:
        group_w = 128
    else:
        group_w = H
    num_groups = H // group_w
    heads_per_group = group_w // Dh
    scale = 1.0 / math.sqrt(Dh)
    blk_bytes = 2 * (S * 3 * group_w * 2 + S * 4 + S * group_w * 2)
    return pl.pallas_call(
        functools.partial(_attn_kernel, heads=heads_per_group, head_dim=Dh,
                          scale=scale),
        out_shape=jax.ShapeDtypeStruct((B, S, H), jnp.bfloat16),
        grid=(B, num_groups),
        in_specs=[pl.BlockSpec((1, S, 3, group_w), lambda b, g: (b, 0, 0, g)),
                  pl.BlockSpec((1, 1, S), lambda b, g: (b, 0, 0))],
        out_specs=pl.BlockSpec((1, S, group_w), lambda b, g: (b, 0, g)),
        compiler_params=pltpu.CompilerParams(
            dimension_semantics=("parallel", "parallel"),
            vmem_limit_bytes=_vmem_limit(blk_bytes)),
    )(qkv, mask_bias)


# --------------------------------- BERT model ---------------------------------

class Config:
    vocab_size = 100
    hidden = 32
    num_layers = 2
    num_heads = 2
    head_dim = 16          # hidden // num_heads
    intermediate = 64
    max_position = 32
    type_vocab = 2


def init_params(cfg, key):
    # Matmul weights and embedding tables are stored in bf16 once at init
    # (no per-forward HBM cast); biases and LN params stay f32.
    def nrm(key, shape, scale=0.02, dtype=jnp.bfloat16):
        return (scale * jax.random.normal(key, shape, dtype=jnp.float32)).astype(dtype)

    keys = iter(jax.random.split(key, 256))
    p = {
        "word_emb": nrm(next(keys), (cfg.vocab_size, cfg.hidden)),
        "pos_emb": nrm(next(keys), (cfg.max_position, cfg.hidden)),
        "type_emb": nrm(next(keys), (cfg.type_vocab, cfg.hidden)),
        "emb_ln_g": jnp.ones((cfg.hidden,), jnp.float32),
        "emb_ln_b": jnp.zeros((cfg.hidden,), jnp.float32),
        "pool_w": nrm(next(keys), (cfg.hidden, cfg.hidden)),
        "pool_b": jnp.zeros((cfg.hidden,), jnp.float32),
        "layers": [],
    }
    for _ in range(cfg.num_layers):
        p["layers"].append({
            # fused Q|K|V projection: (H, 3H) weight, (3H,) bias (columns = Q,K,V)
            "qkv_w": nrm(next(keys), (cfg.hidden, 3 * cfg.hidden)),
            "qkv_b": jnp.zeros((3 * cfg.hidden,), jnp.float32),
            "ao_w": nrm(next(keys), (cfg.hidden, cfg.hidden)),
            "ao_b": jnp.zeros((cfg.hidden,), jnp.float32),
            "ln1_g": jnp.ones((cfg.hidden,), jnp.float32),
            "ln1_b": jnp.zeros((cfg.hidden,), jnp.float32),
            "ff1_w": nrm(next(keys), (cfg.hidden, cfg.intermediate)),
            "ff1_b": jnp.zeros((cfg.intermediate,), jnp.float32),
            "ff2_w": nrm(next(keys), (cfg.intermediate, cfg.hidden)),
            "ff2_b": jnp.zeros((cfg.hidden,), jnp.float32),
            "ln2_g": jnp.ones((cfg.hidden,), jnp.float32),
            "ln2_b": jnp.zeros((cfg.hidden,), jnp.float32),
        })
    return p


def text_bert_embedding_forward(params, cfg, tokens, segments, input_masks):
    """Equivalent of TextBertEmbeddingModel.forward -> BertModel(...)[1] (pooled)."""
    B, S = tokens.shape
    H, NH = cfg.hidden, cfg.num_heads

    # --- embeddings (gathers are glue; plain JAX, bf16 activations) ---
    word = jnp.take(params["word_emb"], tokens, axis=0)            # (B,S,H) bf16
    pos = jnp.take(params["pos_emb"], jnp.arange(S), axis=0)       # (S,H)   bf16
    typ = jnp.take(params["type_emb"], segments, axis=0)           # (B,S,H) bf16
    emb = word + pos[None, :, :] + typ
    x = layernorm(emb.reshape(B * S, H), params["emb_ln_g"], params["emb_ln_b"])

    # additive attention-mask bias, precomputed once for all layers/heads
    mask_bias = (1.0 - input_masks.astype(jnp.float32)).reshape(B, 1, S) * (-1e9)

    for layer in params["layers"]:
        flat = x                                                    # (B*S, H) bf16
        # fused QKV projection (one HBM pass over the activation)
        qkv = linear(flat, layer["qkv_w"], layer["qkv_b"])          # (B*S, 3H) bf16
        qkv4 = qkv.reshape(B, S, 3, H)                              # free reshape
        ctx = attention(qkv4, mask_bias, NH)                        # (B, S, H) bf16
        attn_out = linear(ctx.reshape(B * S, H), layer["ao_w"], layer["ao_b"])
        x1 = residual_layernorm(flat, attn_out, layer["ln1_g"], layer["ln1_b"])
        # feed-forward
        h = linear(x1, layer["ff1_w"], layer["ff1_b"], activation="gelu")
        h2 = linear(h, layer["ff2_w"], layer["ff2_b"])
        x = residual_layernorm(x1, h2, layer["ln2_g"], layer["ln2_b"])

    hidden = x.reshape(B, S, H)
    cls = hidden[:, 0, :]                                           # (B, H) bf16
    pooled = linear(cls, params["pool_w"], params["pool_b"],
                    activation="tanh", out_dtype=jnp.float32)
    return pooled                                                   # == output[1]


# ------------------------------------ main ------------------------------------

if __name__ == "__main__":
    cfg = Config()
    B, S = 2, 8

    key = jax.random.PRNGKey(0)
    k_param, k_tok, _ = jax.random.split(key, 3)

    params = init_params(cfg, k_param)

    tokens = jax.random.randint(k_tok, (B, S), 0, cfg.vocab_size, dtype=jnp.int32)
    segments = jnp.concatenate(
        [jnp.zeros((B, S // 2), jnp.int32), jnp.ones((B, S // 2), jnp.int32)], axis=1)
    input_masks = jnp.array([[1, 1, 1, 1, 1, 1, 1, 1],
                             [1, 1, 1, 1, 1, 1, 0, 0]], dtype=jnp.int32)

    fwd = jax.jit(lambda p, t, s, m: text_bert_embedding_forward(p, cfg, t, s, m))
    pooled = jax.block_until_ready(fwd(params, tokens, segments, input_masks))

    assert pooled.shape == (B, cfg.hidden)
    assert bool(jnp.all(jnp.isfinite(pooled)))
    print("KERNEL_OK")
</pallas_src>

<mosaic_0001>
module attributes {stable_mosaic.version = 11 : i64} {
  func.func @_attn_kernel(%arg0: i32, %arg1: i32, %arg2: memref<1x8x3x32xbf16, #tpu.memory_space<vmem>>, %arg3: memref<1x1x8xf32, #tpu.memory_space<vmem>>, %arg4: memref<1x8x32xbf16, #tpu.memory_space<vmem>>) attributes {dimension_semantics = [#tpu.dimension_semantics<parallel>, #tpu.dimension_semantics<parallel>], iteration_bounds = array<i64: 2, 1>, scalar_prefetch = 0 : i64, scratch_operands = 0 : i64, tpu.core_type = #tpu.core_type<tc>, window_params = [{transform_indices = @transform_0, window_bounds = array<i64: 1, 8, 3, 32>}, {transform_indices = @transform_1, window_bounds = array<i64: 1, 1, 8>}, {transform_indices = @transform_2, window_bounds = array<i64: 1, 8, 32>}]} {
    %c0 = arith.constant 0 : index
    %c0_0 = arith.constant 0 : index
    %c0_1 = arith.constant 0 : index
    %c0_2 = arith.constant 0 : index
    %0 = vector.load %arg2[%c0, %c0_0, %c0_1, %c0_2] : memref<1x8x3x32xbf16, #tpu.memory_space<vmem>>, vector<1x8x3x32xbf16>
    %1 = vector.shape_cast %0 : vector<1x8x3x32xbf16> to vector<8x3x32xbf16>
    %c0_3 = arith.constant 0 : index
    %c0_4 = arith.constant 0 : index
    %c0_5 = arith.constant 0 : index
    %2 = vector.load %arg3[%c0_3, %c0_4, %c0_5] : memref<1x1x8xf32, #tpu.memory_space<vmem>>, vector<1x1x8xf32>
    %3 = vector.shape_cast %2 : vector<1x1x8xf32> to vector<1x8xf32>
    %4 = vector.extract_strided_slice %1 {offsets = [0, 0, 0], sizes = [8, 1, 16], strides = [1, 1, 1]} : vector<8x3x32xbf16> to vector<8x1x16xbf16>
    %5 = vector.shape_cast %4 : vector<8x1x16xbf16> to vector<8x16xbf16>
    %cst = arith.constant 2.500000e-01 : bf16
    %6 = vector.broadcast %cst : bf16 to vector<8x16xbf16>
    %7 = arith.mulf %5, %6 : vector<8x16xbf16>
    %8 = vector.extract_strided_slice %1 {offsets = [0, 1, 0], sizes = [8, 1, 16], strides = [1, 1, 1]} : vector<8x3x32xbf16> to vector<8x1x16xbf16>
    %9 = vector.shape_cast %8 : vector<8x1x16xbf16> to vector<8x16xbf16>
    %10 = vector.extract_strided_slice %1 {offsets = [0, 2, 0], sizes = [8, 1, 16], strides = [1, 1, 1]} : vector<8x3x32xbf16> to vector<8x1x16xbf16>
    %11 = vector.shape_cast %10 : vector<8x1x16xbf16> to vector<8x16xbf16>
    %cst_6 = arith.constant dense<0.000000e+00> : vector<8x8xf32>
    %12 = tpu.matmul %7, %9, %cst_6 {dimension_numbers = #tpu.dot_dimension_numbers<[1], [1], [0], [0], [0, 0, 1, 0], [], []>} : vector<8x16xbf16>, vector<8x16xbf16>, vector<8x8xf32> -> vector<8x8xf32>
    %13 = vector.broadcast %3 : vector<1x8xf32> to vector<8x8xf32>
    %14 = arith.addf %12, %13 : vector<8x8xf32>
    %cst_7 = arith.constant dense<0xFF800000> : vector<8xf32>
    %15 = vector.multi_reduction <maximumf>, %14, %cst_7 [1] : vector<8x8xf32> to vector<8xf32>
    %16 = vector.shape_cast %15 : vector<8xf32> to vector<8x1xf32>
    %17 = vector.broadcast %16 : vector<8x1xf32> to vector<8x8xf32>
    %18 = arith.subf %14, %17 : vector<8x8xf32>
    %19 = math.exp %18 : vector<8x8xf32>
    %cst_8 = arith.constant dense<0.000000e+00> : vector<8xf32>
    %20 = vector.multi_reduction <add>, %19, %cst_8 [1] : vector<8x8xf32> to vector<8xf32>
    %21 = vector.shape_cast %20 : vector<8xf32> to vector<8x1xf32>
    %22 = tpu.reciprocal %21 {approx = true} : vector<8x1xf32> -> vector<8x1xf32>
    %23 = vector.broadcast %22 : vector<8x1xf32> to vector<8x8xf32>
    %24 = arith.mulf %19, %23 : vector<8x8xf32>
    %25 = arith.truncf %24 : vector<8x8xf32> to vector<8x8xbf16>
    %cst_9 = arith.constant dense<0.000000e+00> : vector<8x16xf32>
    %26 = tpu.matmul %25, %11, %cst_9 {dimension_numbers = #tpu.dot_dimension_numbers<[1], [0], [0], [1], [0, 0, 1, 1], [], []>} : vector<8x8xbf16>, vector<8x16xbf16>, vector<8x16xf32> -> vector<8x16xf32>
    %27 = arith.truncf %26 : vector<8x16xf32> to vector<8x16xbf16>
    %c0_10 = arith.constant 0 : index
    %c0_11 = arith.constant 0 : index
    %c0_12 = arith.constant 0 : index
    %28 = vector.load %arg4[%c0_10, %c0_11, %c0_12] : memref<1x8x32xbf16, #tpu.memory_space<vmem>>, vector<1x8x16xbf16>
    %29 = vector.shape_cast %28 : vector<1x8x16xbf16> to vector<8x16xbf16>
    %30 = vector.shape_cast %27 : vector<8x16xbf16> to vector<1x8x16xbf16>
    tpu.vector_store %arg4[%c0_10, %c0_11, %c0_12], %30 {strides = array<i32>} : memref<1x8x32xbf16, #tpu.memory_space<vmem>>, vector<1x8x16xbf16>,
    %31 = vector.extract_strided_slice %1 {offsets = [0, 0, 16], sizes = [8, 1, 16], strides = [1, 1, 1]} : vector<8x3x32xbf16> to vector<8x1x16xbf16>
    %32 = vector.shape_cast %31 : vector<8x1x16xbf16> to vector<8x16xbf16>
    %cst_13 = arith.constant 2.500000e-01 : bf16
    %33 = vector.broadcast %cst_13 : bf16 to vector<8x16xbf16>
    %34 = arith.mulf %32, %33 : vector<8x16xbf16>
    %35 = vector.extract_strided_slice %1 {offsets = [0, 1, 16], sizes = [8, 1, 16], strides = [1, 1, 1]} : vector<8x3x32xbf16> to vector<8x1x16xbf16>
    %36 = vector.shape_cast %35 : vector<8x1x16xbf16> to vector<8x16xbf16>
    %37 = vector.extract_strided_slice %1 {offsets = [0, 2, 16], sizes = [8, 1, 16], strides = [1, 1, 1]} : vector<8x3x32xbf16> to vector<8x1x16xbf16>
    %38 = vector.shape_cast %37 : vector<8x1x16xbf16> to vector<8x16xbf16>
    %cst_14 = arith.constant dense<0.000000e+00> : vector<8x8xf32>
    %39 = tpu.matmul %34, %36, %cst_14 {dimension_numbers = #tpu.dot_dimension_numbers<[1], [1], [0], [0], [0, 0, 1, 0], [], []>} : vector<8x16xbf16>, vector<8x16xbf16>, vector<8x8xf32> -> vector<8x8xf32>
    %40 = vector.broadcast %3 : vector<1x8xf32> to vector<8x8xf32>
    %41 = arith.addf %39, %40 : vector<8x8xf32>
    %cst_15 = arith.constant dense<0xFF800000> : vector<8xf32>
    %42 = vector.multi_reduction <maximumf>, %41, %cst_15 [1] : vector<8x8xf32> to vector<8xf32>
    %43 = vector.shape_cast %42 : vector<8xf32> to vector<8x1xf32>
    %44 = vector.broadcast %43 : vector<8x1xf32> to vector<8x8xf32>
    %45 = arith.subf %41, %44 : vector<8x8xf32>
    %46 = math.exp %45 : vector<8x8xf32>
    %cst_16 = arith.constant dense<0.000000e+00> : vector<8xf32>
    %47 = vector.multi_reduction <add>, %46, %cst_16 [1] : vector<8x8xf32> to vector<8xf32>
    %48 = vector.shape_cast %47 : vector<8xf32> to vector<8x1xf32>
    %49 = tpu.reciprocal %48 {approx = true} : vector<8x1xf32> -> vector<8x1xf32>
    %50 = vector.broadcast %49 : vector<8x1xf32> to vector<8x8xf32>
    %51 = arith.mulf %46, %50 : vector<8x8xf32>
    %52 = arith.truncf %51 : vector<8x8xf32> to vector<8x8xbf16>
    %cst_17 = arith.constant dense<0.000000e+00> : vector<8x16xf32>
    %53 = tpu.matmul %52, %38, %cst_17 {dimension_numbers = #tpu.dot_dimension_numbers<[1], [0], [0], [1], [0, 0, 1, 1], [], []>} : vector<8x8xbf16>, vector<8x16xbf16>, vector<8x16xf32> -> vector<8x16xf32>
    %54 = arith.truncf %53 : vector<8x16xf32> to vector<8x16xbf16>
    %c0_18 = arith.constant 0 : index
    %c0_19 = arith.constant 0 : index
    %c16 = arith.constant 16 : index
    %55 = vector.load %arg4[%c0_18, %c0_19, %c16] : memref<1x8x32xbf16, #tpu.memory_space<vmem>>, vector<1x8x16xbf16>
    %56 = vector.shape_cast %55 : vector<1x8x16xbf16> to vector<8x16xbf16>
    %57 = vector.shape_cast %54 : vector<8x16xbf16> to vector<1x8x16xbf16>
    tpu.vector_store %arg4[%c0_18, %c0_19, %c16], %57 {strides = array<i32>} : memref<1x8x32xbf16, #tpu.memory_space<vmem>>, vector<1x8x16xbf16>,
    return
  }
  func.func @transform_0(%arg0: i32, %arg1: i32) -> (i32, i32, i32, i32) {
    %c0_i32 = arith.constant 0 : i32
    %c0_i32_0 = arith.constant 0 : i32
    %c0_i32_1 = arith.constant 0 : i32
    return %arg0, %c0_i32, %c0_i32_0, %arg1 : i32, i32, i32, i32
  }
  func.func @transform_1(%arg0: i32, %arg1: i32) -> (i32, i32, i32) {
    %c0_i32 = arith.constant 0 : i32
    %c0_i32_0 = arith.constant 0 : i32
    %c0_i32_1 = arith.constant 0 : i32
    return %arg0, %c0_i32, %c0_i32_0 : i32, i32, i32
  }
  func.func @transform_2(%arg0: i32, %arg1: i32) -> (i32, i32, i32) {
    %c0_i32 = arith.constant 0 : i32
    %c0_i32_0 = arith.constant 0 : i32
    return %arg0, %c0_i32, %arg1 : i32, i32, i32
  }
}

module attributes {stable_mosaic.version = 11 : i64} {
  func.func @_layernorm_kernel(%arg0: i32, %arg1: memref<16x32xbf16, #tpu.memory_space<vmem>>, %arg2: memref<1x32xf32, #tpu.memory_space<vmem>>, %arg3: memref<1x32xf32, #tpu.memory_space<vmem>>, %arg4: memref<16x32xbf16, #tpu.memory_space<vmem>>) attributes {dimension_semantics = [#tpu.dimension_semantics<parallel>], iteration_bounds = array<i64: 1>, scalar_prefetch = 0 : i64, scratch_operands = 0 : i64, tpu.core_type = #tpu.core_type<tc>, window_params = [{transform_indices = @transform_0, window_bounds = array<i64: 16, 32>}, {pipeline_mode = #tpu.pipeline_mode<synchronous>, transform_indices = @transform_1, window_bounds = array<i64: 1, 32>}, {pipeline_mode = #tpu.pipeline_mode<synchronous>, transform_indices = @transform_2, window_bounds = array<i64: 1, 32>}, {transform_indices = @transform_3, window_bounds = array<i64: 16, 32>}]} {
    %c0 = arith.constant 0 : index
    %c0_0 = arith.constant 0 : index
    %0 = vector.load %arg1[%c0, %c0_0] : memref<16x32xbf16, #tpu.memory_space<vmem>>, vector<16x32xbf16>
    %c0_1 = arith.constant 0 : index
    %c0_2 = arith.constant 0 : index
    %1 = vector.load %arg2[%c0_1, %c0_2] : memref<1x32xf32, #tpu.memory_space<vmem>>, vector<1x32xf32>
    %c0_3 = arith.constant 0 : index
    %c0_4 = arith.constant 0 : index
    %2 = vector.load %arg3[%c0_3, %c0_4] : memref<1x32xf32, #tpu.memory_space<vmem>>, vector<1x32xf32>
    %3 = arith.extf %0 : vector<16x32xbf16> to vector<16x32xf32>
    %cst = arith.constant dense<0.000000e+00> : vector<16xf32>
    %4 = vector.multi_reduction <add>, %3, %cst [1] : vector<16x32xf32> to vector<16xf32>
    %5 = vector.shape_cast %4 : vector<16xf32> to vector<16x1xf32>
    %cst_5 = arith.constant 3.200000e+01 : f32
    %6 = vector.broadcast %cst_5 : f32 to vector<16x1xf32>
    %7 = arith.divf %5, %6 : vector<16x1xf32>
    %8 = vector.broadcast %7 : vector<16x1xf32> to vector<16x32xf32>
    %9 = arith.subf %3, %8 : vector<16x32xf32>
    %10 = arith.mulf %9, %9 : vector<16x32xf32>
    %cst_6 = arith.constant dense<0.000000e+00> : vector<16xf32>
    %11 = vector.multi_reduction <add>, %10, %cst_6 [1] : vector<16x32xf32> to vector<16xf32>
    %12 = vector.shape_cast %11 : vector<16xf32> to vector<16x1xf32>
    %cst_7 = arith.constant 3.200000e+01 : f32
    %13 = vector.broadcast %cst_7 : f32 to vector<16x1xf32>
    %14 = arith.divf %12, %13 : vector<16x1xf32>
    %cst_8 = arith.constant 9.99999996E-13 : f32
    %15 = vector.broadcast %cst_8 : f32 to vector<16x1xf32>
    %16 = arith.addf %14, %15 : vector<16x1xf32>
    %17 = math.rsqrt %16 : vector<16x1xf32>
    %18 = vector.broadcast %7 : vector<16x1xf32> to vector<16x32xf32>
    %19 = arith.subf %3, %18 : vector<16x32xf32>
    %20 = vector.broadcast %17 : vector<16x1xf32> to vector<16x32xf32>
    %21 = arith.mulf %19, %20 : vector<16x32xf32>
    %22 = vector.broadcast %1 : vector<1x32xf32> to vector<16x32xf32>
    %23 = arith.mulf %21, %22 : vector<16x32xf32>
    %24 = vector.broadcast %2 : vector<1x32xf32> to vector<16x32xf32>
    %25 = arith.addf %23, %24 : vector<16x32xf32>
    %26 = arith.truncf %25 : vector<16x32xf32> to vector<16x32xbf16>
    %c0_9 = arith.constant 0 : index
    %c0_10 = arith.constant 0 : index
    %27 = vector.load %arg4[%c0_9, %c0_10] : memref<16x32xbf16, #tpu.memory_space<vmem>>, vector<16x32xbf16>
    tpu.vector_store %arg4[%c0_9, %c0_10], %26 {strides = array<i32>} : memref<16x32xbf16, #tpu.memory_space<vmem>>, vector<16x32xbf16>,
    return
  }
  func.func @transform_0(%arg0: i32) -> (i32, i32) {
    %c0_i32 = arith.constant 0 : i32
    %c0_i32_0 = arith.constant 0 : i32
    return %arg0, %c0_i32 : i32, i32
  }
  func.func @transform_1(%arg0: i32) -> (i32, i32) {
    %c0_i32 = arith.constant 0 : i32
    %c0_i32_0 = arith.constant 0 : i32
    %c0_i32_1 = arith.constant 0 : i32
    return %c0_i32, %c0_i32_0 : i32, i32
  }
  func.func @transform_2(%arg0: i32) -> (i32, i32) {
    %c0_i32 = arith.constant 0 : i32
    %c0_i32_0 = arith.constant 0 : i32
    %c0_i32_1 = arith.constant 0 : i32
    return %c0_i32, %c0_i32_0 : i32, i32
  }
  func.func @transform_3(%arg0: i32) -> (i32, i32) {
    %c0_i32 = arith.constant 0 : i32
    %c0_i32_0 = arith.constant 0 : i32
    return %arg0, %c0_i32 : i32, i32
  }
}

module attributes {stable_mosaic.version = 11 : i64} {
  func.func @_linear_kernel(%arg0: i32, %arg1: i32, %arg2: i32, %arg3: memref<16x32xbf16, #tpu.memory_space<vmem>>, %arg4: memref<32x96xbf16, #tpu.memory_space<vmem>>, %arg5: memref<1x96xf32, #tpu.memory_space<vmem>>, %arg6: memref<16x96xbf16, #tpu.memory_space<vmem>>, %arg7: memref<16x96xf32, #tpu.memory_space<vmem>>) attributes {dimension_semantics = [#tpu.dimension_semantics<parallel>, #tpu.dimension_semantics<parallel>, #tpu.dimension_semantics<arbitrary>], iteration_bounds = array<i64: 1, 1, 1>, scalar_prefetch = 0 : i64, scratch_operands = 1 : i64, tpu.core_type = #tpu.core_type<tc>, window_params = [{transform_indices = @transform_0, window_bounds = array<i64: 16, 32>}, {transform_indices = @transform_1, window_bounds = array<i64: 32, 96>}, {transform_indices = @transform_2, window_bounds = array<i64: 1, 96>}, {transform_indices = @transform_3, window_bounds = array<i64: 16, 96>}]} {
    %c0_i32 = arith.constant 0 : i32
    %0 = arith.cmpi eq, %arg2, %c0_i32 : i32
    %1 = arith.extui %0 : i1 to i32
    %c0_i32_0 = arith.constant 0 : i32
    %2 = arith.cmpi ne, %1, %c0_i32_0 : i32
    scf.if %2 {
      %cst_10 = arith.constant 0.000000e+00 : f32
      %12 = vector.broadcast %cst_10 : f32 to vector<16x96xf32>
      %c0_11 = arith.constant 0 : index
      %c0_12 = arith.constant 0 : index
      %13 = vector.load %arg7[%c0_11, %c0_12] : memref<16x96xf32, #tpu.memory_space<vmem>>, vector<16x96xf32>
      tpu.vector_store %arg7[%c0_11, %c0_12], %12 {strides = array<i32>} : memref<16x96xf32, #tpu.memory_space<vmem>>, vector<16x96xf32>,
    } else {
    }
    %c0 = arith.constant 0 : index
    %c0_1 = arith.constant 0 : index
    %3 = vector.load %arg7[%c0, %c0_1] : memref<16x96xf32, #tpu.memory_space<vmem>>, vector<16x96xf32>
    %c0_2 = arith.constant 0 : index
    %c0_3 = arith.constant 0 : index
    %4 = vector.load %arg3[%c0_2, %c0_3] : memref<16x32xbf16, #tpu.memory_space<vmem>>, vector<16x32xbf16>
    %c0_4 = arith.constant 0 : index
    %c0_5 = arith.constant 0 : index
    %5 = vector.load %arg4[%c0_4, %c0_5] : memref<32x96xbf16, #tpu.memory_space<vmem>>, vector<32x96xbf16>
    %cst = arith.constant dense<0.000000e+00> : vector<16x96xf32>
    %6 = tpu.matmul %4, %5, %cst {dimension_numbers = #tpu.dot_dimension_numbers<[1], [0], [0], [1], [0, 0, 1, 1], [], []>} : vector<16x32xbf16>, vector<32x96xbf16>, vector<16x96xf32> -> vector<16x96xf32>
    %7 = arith.addf %3, %6 : vector<16x96xf32>
    %c0_6 = arith.constant 0 : index
    %c0_7 = arith.constant 0 : index
    %8 = vector.load %arg7[%c0_6, %c0_7] : memref<16x96xf32, #tpu.memory_space<vmem>>, vector<16x96xf32>
    tpu.vector_store %arg7[%c0_6, %c0_7], %7 {strides = array<i32>} : memref<16x96xf32, #tpu.memory_space<vmem>>, vector<16x96xf32>,
    %c0_i32_8 = arith.constant 0 : i32
    %9 = arith.cmpi eq, %arg2, %c0_i32_8 : i32
    %10 = arith.extui %9 : i1 to i32
    %c0_i32_9 = arith.constant 0 : i32
    %11 = arith.cmpi ne, %10, %c0_i32_9 : i32
    scf.if %11 {
      %c0_10 = arith.constant 0 : index
      %c0_11 = arith.constant 0 : index
      %12 = vector.load %arg7[%c0_10, %c0_11] : memref<16x96xf32, #tpu.memory_space<vmem>>, vector<16x96xf32>
      %c0_12 = arith.constant 0 : index
      %c0_13 = arith.constant 0 : index
      %13 = vector.load %arg5[%c0_12, %c0_13] : memref<1x96xf32, #tpu.memory_space<vmem>>, vector<1x96xf32>
      %14 = vector.broadcast %13 : vector<1x96xf32> to vector<16x96xf32>
      %15 = arith.addf %12, %14 : vector<16x96xf32>
      %16 = arith.truncf %15 : vector<16x96xf32> to vector<16x96xbf16>
      %c0_14 = arith.constant 0 : index
      %c0_15 = arith.constant 0 : index
      %17 = vector.load %arg6[%c0_14, %c0_15] : memref<16x96xbf16, #tpu.memory_space<vmem>>, vector<16x96xbf16>
      tpu.vector_store %arg6[%c0_14, %c0_15], %16 {strides = array<i32>} : memref<16x96xbf16, #tpu.memory_space<vmem>>, vector<16x96xbf16>,
    } else {
    }
    return
  }
  func.func @transform_0(%arg0: i32, %arg1: i32, %arg2: i32) -> (i32, i32) {
    %c0_i32 = arith.constant 0 : i32
    return %arg0, %arg2 : i32, i32
  }
  func.func @transform_1(%arg0: i32, %arg1: i32, %arg2: i32) -> (i32, i32) {
    %c0_i32 = arith.constant 0 : i32
    return %arg2, %arg1 : i32, i32
  }
  func.func @transform_2(%arg0: i32, %arg1: i32, %arg2: i32) -> (i32, i32) {
    %c0_i32 = arith.constant 0 : i32
    %c0_i32_0 = arith.constant 0 : i32
    return %c0_i32, %arg1 : i32, i32
  }
  func.func @transform_3(%arg0: i32, %arg1: i32, %arg2: i32) -> (i32, i32) {
    %c0_i32 = arith.constant 0 : i32
    return %arg0, %arg1 : i32, i32
  }
}

module attributes {stable_mosaic.version = 11 : i64} {
  func.func @_linear_kernel(%arg0: i32, %arg1: i32, %arg2: i32, %arg3: memref<16x32xbf16, #tpu.memory_space<vmem>>, %arg4: memref<32x32xbf16, #tpu.memory_space<vmem>>, %arg5: memref<1x32xf32, #tpu.memory_space<vmem>>, %arg6: memref<16x32xbf16, #tpu.memory_space<vmem>>, %arg7: memref<16x32xf32, #tpu.memory_space<vmem>>) attributes {dimension_semantics = [#tpu.dimension_semantics<parallel>, #tpu.dimension_semantics<parallel>, #tpu.dimension_semantics<arbitrary>], iteration_bounds = array<i64: 1, 1, 1>, scalar_prefetch = 0 : i64, scratch_operands = 1 : i64, tpu.core_type = #tpu.core_type<tc>, window_params = [{transform_indices = @transform_0, window_bounds = array<i64: 16, 32>}, {transform_indices = @transform_1, window_bounds = array<i64: 32, 32>}, {transform_indices = @transform_2, window_bounds = array<i64: 1, 32>}, {transform_indices = @transform_3, window_bounds = array<i64: 16, 32>}]} {
    %c0_i32 = arith.constant 0 : i32
    %0 = arith.cmpi eq, %arg2, %c0_i32 : i32
    %1 = arith.extui %0 : i1 to i32
    %c0_i32_0 = arith.constant 0 : i32
    %2 = arith.cmpi ne, %1, %c0_i32_0 : i32
    scf.if %2 {
      %cst_10 = arith.constant 0.000000e+00 : f32
      %12 = vector.broadcast %cst_10 : f32 to vector<16x32xf32>
      %c0_11 = arith.constant 0 : index
      %c0_12 = arith.constant 0 : index
      %13 = vector.load %arg7[%c0_11, %c0_12] : memref<16x32xf32, #tpu.memory_space<vmem>>, vector<16x32xf32>
      tpu.vector_store %arg7[%c0_11, %c0_12], %12 {strides = array<i32>} : memref<16x32xf32, #tpu.memory_space<vmem>>, vector<16x32xf32>,
    } else {
    }
    %c0 = arith.constant 0 : index
    %c0_1 = arith.constant 0 : index
    %3 = vector.load %arg7[%c0, %c0_1] : memref<16x32xf32, #tpu.memory_space<vmem>>, vector<16x32xf32>
    %c0_2 = arith.constant 0 : index
    %c0_3 = arith.constant 0 : index
    %4 = vector.load %arg3[%c0_2, %c0_3] : memref<16x32xbf16, #tpu.memory_space<vmem>>, vector<16x32xbf16>
    %c0_4 = arith.constant 0 : index
    %c0_5 = arith.constant 0 : index
    %5 = vector.load %arg4[%c0_4, %c0_5] : memref<32x32xbf16, #tpu.memory_space<vmem>>, vector<32x32xbf16>
    %cst = arith.constant dense<0.000000e+00> : vector<16x32xf32>
    %6 = tpu.matmul %4, %5, %cst {dimension_numbers = #tpu.dot_dimension_numbers<[1], [0], [0], [1], [0, 0, 1, 1], [], []>} : vector<16x32xbf16>, vector<32x32xbf16>, vector<16x32xf32> -> vector<16x32xf32>
    %7 = arith.addf %3, %6 : vector<16x32xf32>
    %c0_6 = arith.constant 0 : index
    %c0_7 = arith.constant 0 : index
    %8 = vector.load %arg7[%c0_6, %c0_7] : memref<16x32xf32, #tpu.memory_space<vmem>>, vector<16x32xf32>
    tpu.vector_store %arg7[%c0_6, %c0_7], %7 {strides = array<i32>} : memref<16x32xf32, #tpu.memory_space<vmem>>, vector<16x32xf32>,
    %c0_i32_8 = arith.constant 0 : i32
    %9 = arith.cmpi eq, %arg2, %c0_i32_8 : i32
    %10 = arith.extui %9 : i1 to i32
    %c0_i32_9 = arith.constant 0 : i32
    %11 = arith.cmpi ne, %10, %c0_i32_9 : i32
    scf.if %11 {
      %c0_10 = arith.constant 0 : index
      %c0_11 = arith.constant 0 : index
      %12 = vector.load %arg7[%c0_10, %c0_11] : memref<16x32xf32, #tpu.memory_space<vmem>>, vector<16x32xf32>
      %c0_12 = arith.constant 0 : index
      %c0_13 = arith.constant 0 : index
      %13 = vector.load %arg5[%c0_12, %c0_13] : memref<1x32xf32, #tpu.memory_space<vmem>>, vector<1x32xf32>
      %14 = vector.broadcast %13 : vector<1x32xf32> to vector<16x32xf32>
      %15 = arith.addf %12, %14 : vector<16x32xf32>
      %16 = arith.truncf %15 : vector<16x32xf32> to vector<16x32xbf16>
      %c0_14 = arith.constant 0 : index
      %c0_15 = arith.constant 0 : index
      %17 = vector.load %arg6[%c0_14, %c0_15] : memref<16x32xbf16, #tpu.memory_space<vmem>>, vector<16x32xbf16>
      tpu.vector_store %arg6[%c0_14, %c0_15], %16 {strides = array<i32>} : memref<16x32xbf16, #tpu.memory_space<vmem>>, vector<16x32xbf16>,
    } else {
    }
    return
  }
  func.func @transform_0(%arg0: i32, %arg1: i32, %arg2: i32) -> (i32, i32) {
    %c0_i32 = arith.constant 0 : i32
    return %arg0, %arg2 : i32, i32
  }
  func.func @transform_1(%arg0: i32, %arg1: i32, %arg2: i32) -> (i32, i32) {
    %c0_i32 = arith.constant 0 : i32
    return %arg2, %arg1 : i32, i32
  }
  func.func @transform_2(%arg0: i32, %arg1: i32, %arg2: i32) -> (i32, i32) {
    %c0_i32 = arith.constant 0 : i32
    %c0_i32_0 = arith.constant 0 : i32
    return %c0_i32, %arg1 : i32, i32
  }
  func.func @transform_3(%arg0: i32, %arg1: i32, %arg2: i32) -> (i32, i32) {
    %c0_i32 = arith.constant 0 : i32
    return %arg0, %arg1 : i32, i32
  }
}

module attributes {stable_mosaic.version = 11 : i64} {
  func.func @_linear_kernel(%arg0: i32, %arg1: i32, %arg2: i32, %arg3: memref<16x32xbf16, #tpu.memory_space<vmem>>, %arg4: memref<32x64xbf16, #tpu.memory_space<vmem>>, %arg5: memref<1x64xf32, #tpu.memory_space<vmem>>, %arg6: memref<16x64xbf16, #tpu.memory_space<vmem>>, %arg7: memref<16x64xf32, #tpu.memory_space<vmem>>) attributes {dimension_semantics = [#tpu.dimension_semantics<parallel>, #tpu.dimension_semantics<parallel>, #tpu.dimension_semantics<arbitrary>], iteration_bounds = array<i64: 1, 1, 1>, scalar_prefetch = 0 : i64, scratch_operands = 1 : i64, tpu.core_type = #tpu.core_type<tc>, window_params = [{transform_indices = @transform_0, window_bounds = array<i64: 16, 32>}, {transform_indices = @transform_1, window_bounds = array<i64: 32, 64>}, {transform_indices = @transform_2, window_bounds = array<i64: 1, 64>}, {transform_indices = @transform_3, window_bounds = array<i64: 16, 64>}]} {
    %c0_i32 = arith.constant 0 : i32
    %0 = arith.cmpi eq, %arg2, %c0_i32 : i32
    %1 = arith.extui %0 : i1 to i32
    %c0_i32_0 = arith.constant 0 : i32
    %2 = arith.cmpi ne, %1, %c0_i32_0 : i32
    scf.if %2 {
      %cst_10 = arith.constant 0.000000e+00 : f32
      %12 = vector.broadcast %cst_10 : f32 to vector<16x64xf32>
      %c0_11 = arith.constant 0 : index
      %c0_12 = arith.constant 0 : index
      %13 = vector.load %arg7[%c0_11, %c0_12] : memref<16x64xf32, #tpu.memory_space<vmem>>, vector<16x64xf32>
      tpu.vector_store %arg7[%c0_11, %c0_12], %12 {strides = array<i32>} : memref<16x64xf32, #tpu.memory_space<vmem>>, vector<16x64xf32>,
    } else {
    }
    %c0 = arith.constant 0 : index
    %c0_1 = arith.constant 0 : index
    %3 = vector.load %arg7[%c0, %c0_1] : memref<16x64xf32, #tpu.memory_space<vmem>>, vector<16x64xf32>
    %c0_2 = arith.constant 0 : index
    %c0_3 = arith.constant 0 : index
    %4 = vector.load %arg3[%c0_2, %c0_3] : memref<16x32xbf16, #tpu.memory_space<vmem>>, vector<16x32xbf16>
    %c0_4 = arith.constant 0 : index
    %c0_5 = arith.constant 0 : index
    %5 = vector.load %arg4[%c0_4, %c0_5] : memref<32x64xbf16, #tpu.memory_space<vmem>>, vector<32x64xbf16>
    %cst = arith.constant dense<0.000000e+00> : vector<16x64xf32>
    %6 = tpu.matmul %4, %5, %cst {dimension_numbers = #tpu.dot_dimension_numbers<[1], [0], [0], [1], [0, 0, 1, 1], [], []>} : vector<16x32xbf16>, vector<32x64xbf16>, vector<16x64xf32> -> vector<16x64xf32>
    %7 = arith.addf %3, %6 : vector<16x64xf32>
    %c0_6 = arith.constant 0 : index
    %c0_7 = arith.constant 0 : index
    %8 = vector.load %arg7[%c0_6, %c0_7] : memref<16x64xf32, #tpu.memory_space<vmem>>, vector<16x64xf32>
    tpu.vector_store %arg7[%c0_6, %c0_7], %7 {strides = array<i32>} : memref<16x64xf32, #tpu.memory_space<vmem>>, vector<16x64xf32>,
    %c0_i32_8 = arith.constant 0 : i32
    %9 = arith.cmpi eq, %arg2, %c0_i32_8 : i32
    %10 = arith.extui %9 : i1 to i32
    %c0_i32_9 = arith.constant 0 : i32
    %11 = arith.cmpi ne, %10, %c0_i32_9 : i32
    scf.if %11 {
      %c0_10 = arith.constant 0 : index
      %c0_11 = arith.constant 0 : index
      %12 = vector.load %arg7[%c0_10, %c0_11] : memref<16x64xf32, #tpu.memory_space<vmem>>, vector<16x64xf32>
      %c0_12 = arith.constant 0 : index
      %c0_13 = arith.constant 0 : index
      %13 = vector.load %arg5[%c0_12, %c0_13] : memref<1x64xf32, #tpu.memory_space<vmem>>, vector<1x64xf32>
      %14 = vector.broadcast %13 : vector<1x64xf32> to vector<16x64xf32>
      %15 = arith.addf %12, %14 : vector<16x64xf32>
      %cst_14 = arith.constant 5.000000e-01 : f32
      %16 = vector.broadcast %cst_14 : f32 to vector<16x64xf32>
      %17 = arith.mulf %16, %15 : vector<16x64xf32>
      %cst_15 = arith.constant 4.471500e-02 : f32
      %18 = vector.broadcast %cst_15 : f32 to vector<16x64xf32>
      %19 = arith.mulf %18, %15 : vector<16x64xf32>
      %20 = arith.mulf %19, %15 : vector<16x64xf32>
      %21 = arith.mulf %20, %15 : vector<16x64xf32>
      %22 = arith.addf %15, %21 : vector<16x64xf32>
      %cst_16 = arith.constant 0.797884583 : f32
      %23 = vector.broadcast %cst_16 : f32 to vector<16x64xf32>
      %24 = arith.mulf %23, %22 : vector<16x64xf32>
      %25 = math.tanh %24 : vector<16x64xf32>
      %cst_17 = arith.constant 1.000000e+00 : f32
      %26 = vector.broadcast %cst_17 : f32 to vector<16x64xf32>
      %27 = arith.addf %26, %25 : vector<16x64xf32>
      %28 = arith.mulf %17, %27 : vector<16x64xf32>
      %29 = arith.truncf %28 : vector<16x64xf32> to vector<16x64xbf16>
      %c0_18 = arith.constant 0 : index
      %c0_19 = arith.constant 0 : index
      %30 = vector.load %arg6[%c0_18, %c0_19] : memref<16x64xbf16, #tpu.memory_space<vmem>>, vector<16x64xbf16>
      tpu.vector_store %arg6[%c0_18, %c0_19], %29 {strides = array<i32>} : memref<16x64xbf16, #tpu.memory_space<vmem>>, vector<16x64xbf16>,
    } else {
    }
    return
  }
  func.func @transform_0(%arg0: i32, %arg1: i32, %arg2: i32) -> (i32, i32) {
    %c0_i32 = arith.constant 0 : i32
    return %arg0, %arg2 : i32, i32
  }
  func.func @transform_1(%arg0: i32, %arg1: i32, %arg2: i32) -> (i32, i32) {
    %c0_i32 = arith.constant 0 : i32
    return %arg2, %arg1 : i32, i32
  }
  func.func @transform_2(%arg0: i32, %arg1: i32, %arg2: i32) -> (i32, i32) {
    %c0_i32 = arith.constant 0 : i32
    %c0_i32_0 = arith.constant 0 : i32
    return %c0_i32, %arg1 : i32, i32
  }
  func.func @transform_3(%arg0: i32, %arg1: i32, %arg2: i32) -> (i32, i32) {
    %c0_i32 = arith.constant 0 : i32
    return %arg0, %arg1 : i32, i32
  }
}

module attributes {stable_mosaic.version = 11 : i64} {
  func.func @_linear_kernel(%arg0: i32, %arg1: i32, %arg2: i32, %arg3: memref<16x64xbf16, #tpu.memory_space<vmem>>, %arg4: memref<64x32xbf16, #tpu.memory_space<vmem>>, %arg5: memref<1x32xf32, #tpu.memory_space<vmem>>, %arg6: memref<16x32xbf16, #tpu.memory_space<vmem>>, %arg7: memref<16x32xf32, #tpu.memory_space<vmem>>) attributes {dimension_semantics = [#tpu.dimension_semantics<parallel>, #tpu.dimension_semantics<parallel>, #tpu.dimension_semantics<arbitrary>], iteration_bounds = array<i64: 1, 1, 1>, scalar_prefetch = 0 : i64, scratch_operands = 1 : i64, tpu.core_type = #tpu.core_type<tc>, window_params = [{transform_indices = @transform_0, window_bounds = array<i64: 16, 64>}, {transform_indices = @transform_1, window_bounds = array<i64: 64, 32>}, {transform_indices = @transform_2, window_bounds = array<i64: 1, 32>}, {transform_indices = @transform_3, window_bounds = array<i64: 16, 32>}]} {
    %c0_i32 = arith.constant 0 : i32
    %0 = arith.cmpi eq, %arg2, %c0_i32 : i32
    %1 = arith.extui %0 : i1 to i32
    %c0_i32_0 = arith.constant 0 : i32
    %2 = arith.cmpi ne, %1, %c0_i32_0 : i32
    scf.if %2 {
      %cst_10 = arith.constant 0.000000e+00 : f32
      %12 = vector.broadcast %cst_10 : f32 to vector<16x32xf32>
      %c0_11 = arith.constant 0 : index
      %c0_12 = arith.constant 0 : index
      %13 = vector.load %arg7[%c0_11, %c0_12] : memref<16x32xf32, #tpu.memory_space<vmem>>, vector<16x32xf32>
      tpu.vector_store %arg7[%c0_11, %c0_12], %12 {strides = array<i32>} : memref<16x32xf32, #tpu.memory_space<vmem>>, vector<16x32xf32>,
    } else {
    }
    %c0 = arith.constant 0 : index
    %c0_1 = arith.constant 0 : index
    %3 = vector.load %arg7[%c0, %c0_1] : memref<16x32xf32, #tpu.memory_space<vmem>>, vector<16x32xf32>
    %c0_2 = arith.constant 0 : index
    %c0_3 = arith.constant 0 : index
    %4 = vector.load %arg3[%c0_2, %c0_3] : memref<16x64xbf16, #tpu.memory_space<vmem>>, vector<16x64xbf16>
    %c0_4 = arith.constant 0 : index
    %c0_5 = arith.constant 0 : index
    %5 = vector.load %arg4[%c0_4, %c0_5] : memref<64x32xbf16, #tpu.memory_space<vmem>>, vector<64x32xbf16>
    %cst = arith.constant dense<0.000000e+00> : vector<16x32xf32>
    %6 = tpu.matmul %4, %5, %cst {dimension_numbers = #tpu.dot_dimension_numbers<[1], [0], [0], [1], [0, 0, 1, 1], [], []>} : vector<16x64xbf16>, vector<64x32xbf16>, vector<16x32xf32> -> vector<16x32xf32>
    %7 = arith.addf %3, %6 : vector<16x32xf32>
    %c0_6 = arith.constant 0 : index
    %c0_7 = arith.constant 0 : index
    %8 = vector.load %arg7[%c0_6, %c0_7] : memref<16x32xf32, #tpu.memory_space<vmem>>, vector<16x32xf32>
    tpu.vector_store %arg7[%c0_6, %c0_7], %7 {strides = array<i32>} : memref<16x32xf32, #tpu.memory_space<vmem>>, vector<16x32xf32>,
    %c0_i32_8 = arith.constant 0 : i32
    %9 = arith.cmpi eq, %arg2, %c0_i32_8 : i32
    %10 = arith.extui %9 : i1 to i32
    %c0_i32_9 = arith.constant 0 : i32
    %11 = arith.cmpi ne, %10, %c0_i32_9 : i32
    scf.if %11 {
      %c0_10 = arith.constant 0 : index
      %c0_11 = arith.constant 0 : index
      %12 = vector.load %arg7[%c0_10, %c0_11] : memref<16x32xf32, #tpu.memory_space<vmem>>, vector<16x32xf32>
      %c0_12 = arith.constant 0 : index
      %c0_13 = arith.constant 0 : index
      %13 = vector.load %arg5[%c0_12, %c0_13] : memref<1x32xf32, #tpu.memory_space<vmem>>, vector<1x32xf32>
      %14 = vector.broadcast %13 : vector<1x32xf32> to vector<16x32xf32>
      %15 = arith.addf %12, %14 : vector<16x32xf32>
      %16 = arith.truncf %15 : vector<16x32xf32> to vector<16x32xbf16>
      %c0_14 = arith.constant 0 : index
      %c0_15 = arith.constant 0 : index
      %17 = vector.load %arg6[%c0_14, %c0_15] : memref<16x32xbf16, #tpu.memory_space<vmem>>, vector<16x32xbf16>
      tpu.vector_store %arg6[%c0_14, %c0_15], %16 {strides = array<i32>} : memref<16x32xbf16, #tpu.memory_space<vmem>>, vector<16x32xbf16>,
    } else {
    }
    return
  }
  func.func @transform_0(%arg0: i32, %arg1: i32, %arg2: i32) -> (i32, i32) {
    %c0_i32 = arith.constant 0 : i32
    return %arg0, %arg2 : i32, i32
  }
  func.func @transform_1(%arg0: i32, %arg1: i32, %arg2: i32) -> (i32, i32) {
    %c0_i32 = arith.constant 0 : i32
    return %arg2, %arg1 : i32, i32
  }
  func.func @transform_2(%arg0: i32, %arg1: i32, %arg2: i32) -> (i32, i32) {
    %c0_i32 = arith.constant 0 : i32
    %c0_i32_0 = arith.constant 0 : i32
    return %c0_i32, %arg1 : i32, i32
  }
  func.func @transform_3(%arg0: i32, %arg1: i32, %arg2: i32) -> (i32, i32) {
    %c0_i32 = arith.constant 0 : i32
    return %arg0, %arg1 : i32, i32
  }
}

module attributes {stable_mosaic.version = 11 : i64} {
  func.func @_linear_kernel(%arg0: i32, %arg1: i32, %arg2: i32, %arg3: memref<2x32xbf16, #tpu.memory_space<vmem>>, %arg4: memref<32x32xbf16, #tpu.memory_space<vmem>>, %arg5: memref<1x32xf32, #tpu.memory_space<vmem>>, %arg6: memref<2x32xf32, #tpu.memory_space<vmem>>, %arg7: memref<2x32xf32, #tpu.memory_space<vmem>>) attributes {dimension_semantics = [#tpu.dimension_semantics<parallel>, #tpu.dimension_semantics<parallel>, #tpu.dimension_semantics<arbitrary>], iteration_bounds = array<i64: 1, 1, 1>, scalar_prefetch = 0 : i64, scratch_operands = 1 : i64, tpu.core_type = #tpu.core_type<tc>, window_params = [{transform_indices = @transform_0, window_bounds = array<i64: 2, 32>}, {transform_indices = @transform_1, window_bounds = array<i64: 32, 32>}, {transform_indices = @transform_2, window_bounds = array<i64: 1, 32>}, {transform_indices = @transform_3, window_bounds = array<i64: 2, 32>}]} {
    %c0_i32 = arith.constant 0 : i32
    %0 = arith.cmpi eq, %arg2, %c0_i32 : i32
    %1 = arith.extui %0 : i1 to i32
    %c0_i32_0 = arith.constant 0 : i32
    %2 = arith.cmpi ne, %1, %c0_i32_0 : i32
    scf.if %2 {
      %cst_10 = arith.constant 0.000000e+00 : f32
      %12 = vector.broadcast %cst_10 : f32 to vector<2x32xf32>
      %c0_11 = arith.constant 0 : index
      %c0_12 = arith.constant 0 : index
      %13 = vector.load %arg7[%c0_11, %c0_12] : memref<2x32xf32, #tpu.memory_space<vmem>>, vector<2x32xf32>
      tpu.vector_store %arg7[%c0_11, %c0_12], %12 {strides = array<i32>} : memref<2x32xf32, #tpu.memory_space<vmem>>, vector<2x32xf32>,
    } else {
    }
    %c0 = arith.constant 0 : index
    %c0_1 = arith.constant 0 : index
    %3 = vector.load %arg7[%c0, %c0_1] : memref<2x32xf32, #tpu.memory_space<vmem>>, vector<2x32xf32>
    %c0_2 = arith.constant 0 : index
    %c0_3 = arith.constant 0 : index
    %4 = vector.load %arg3[%c0_2, %c0_3] : memref<2x32xbf16, #tpu.memory_space<vmem>>, vector<2x32xbf16>
    %c0_4 = arith.constant 0 : index
    %c0_5 = arith.constant 0 : index
    %5 = vector.load %arg4[%c0_4, %c0_5] : memref<32x32xbf16, #tpu.memory_space<vmem>>, vector<32x32xbf16>
    %cst = arith.constant dense<0.000000e+00> : vector<2x32xf32>
    %6 = tpu.matmul %4, %5, %cst {dimension_numbers = #tpu.dot_dimension_numbers<[1], [0], [0], [1], [0, 0, 1, 1], [], []>} : vector<2x32xbf16>, vector<32x32xbf16>, vector<2x32xf32> -> vector<2x32xf32>
    %7 = arith.addf %3, %6 : vector<2x32xf32>
    %c0_6 = arith.constant 0 : index
    %c0_7 = arith.constant 0 : index
    %8 = vector.load %arg7[%c0_6, %c0_7] : memref<2x32xf32, #tpu.memory_space<vmem>>, vector<2x32xf32>
    tpu.vector_store %arg7[%c0_6, %c0_7], %7 {strides = array<i32>} : memref<2x32xf32, #tpu.memory_space<vmem>>, vector<2x32xf32>,
    %c0_i32_8 = arith.constant 0 : i32
    %9 = arith.cmpi eq, %arg2, %c0_i32_8 : i32
    %10 = arith.extui %9 : i1 to i32
    %c0_i32_9 = arith.constant 0 : i32
    %11 = arith.cmpi ne, %10, %c0_i32_9 : i32
    scf.if %11 {
      %c0_10 = arith.constant 0 : index
      %c0_11 = arith.constant 0 : index
      %12 = vector.load %arg7[%c0_10, %c0_11] : memref<2x32xf32, #tpu.memory_space<vmem>>, vector<2x32xf32>
      %c0_12 = arith.constant 0 : index
      %c0_13 = arith.constant 0 : index
      %13 = vector.load %arg5[%c0_12, %c0_13] : memref<1x32xf32, #tpu.memory_space<vmem>>, vector<1x32xf32>
      %14 = vector.broadcast %13 : vector<1x32xf32> to vector<2x32xf32>
      %15 = arith.addf %12, %14 : vector<2x32xf32>
      %16 = math.tanh %15 : vector<2x32xf32>
      %c0_14 = arith.constant 0 : index
      %c0_15 = arith.constant 0 : index
      %17 = vector.load %arg6[%c0_14, %c0_15] : memref<2x32xf32, #tpu.memory_space<vmem>>, vector<2x32xf32>
      tpu.vector_store %arg6[%c0_14, %c0_15], %16 {strides = array<i32>} : memref<2x32xf32, #tpu.memory_space<vmem>>, vector<2x32xf32>,
    } else {
    }
    return
  }
  func.func @transform_0(%arg0: i32, %arg1: i32, %arg2: i32) -> (i32, i32) {
    %c0_i32 = arith.constant 0 : i32
    return %arg0, %arg2 : i32, i32
  }
  func.func @transform_1(%arg0: i32, %arg1: i32, %arg2: i32) -> (i32, i32) {
    %c0_i32 = arith.constant 0 : i32
    return %arg2, %arg1 : i32, i32
  }
  func.func @transform_2(%arg0: i32, %arg1: i32, %arg2: i32) -> (i32, i32) {
    %c0_i32 = arith.constant 0 : i32
    %c0_i32_0 = arith.constant 0 : i32
    return %c0_i32, %arg1 : i32, i32
  }
  func.func @transform_3(%arg0: i32, %arg1: i32, %arg2: i32) -> (i32, i32) {
    %c0_i32 = arith.constant 0 : i32
    return %arg0, %arg1 : i32, i32
  }
}

module attributes {stable_mosaic.version = 11 : i64} {
  func.func @_residual_layernorm_kernel(%arg0: i32, %arg1: memref<16x32xbf16, #tpu.memory_space<vmem>>, %arg2: memref<16x32xbf16, #tpu.memory_space<vmem>>, %arg3: memref<1x32xf32, #tpu.memory_space<vmem>>, %arg4: memref<1x32xf32, #tpu.memory_space<vmem>>, %arg5: memref<16x32xbf16, #tpu.memory_space<vmem>>) attributes {dimension_semantics = [#tpu.dimension_semantics<parallel>], iteration_bounds = array<i64: 1>, scalar_prefetch = 0 : i64, scratch_operands = 0 : i64, tpu.core_type = #tpu.core_type<tc>, window_params = [{transform_indices = @transform_0, window_bounds = array<i64: 16, 32>}, {transform_indices = @transform_1, window_bounds = array<i64: 16, 32>}, {pipeline_mode = #tpu.pipeline_mode<synchronous>, transform_indices = @transform_2, window_bounds = array<i64: 1, 32>}, {pipeline_mode = #tpu.pipeline_mode<synchronous>, transform_indices = @transform_3, window_bounds = array<i64: 1, 32>}, {transform_indices = @transform_4, window_bounds = array<i64: 16, 32>}]} {
    %c0 = arith.constant 0 : index
    %c0_0 = arith.constant 0 : index
    %0 = vector.load %arg1[%c0, %c0_0] : memref<16x32xbf16, #tpu.memory_space<vmem>>, vector<16x32xbf16>
    %1 = arith.extf %0 : vector<16x32xbf16> to vector<16x32xf32>
    %c0_1 = arith.constant 0 : index
    %c0_2 = arith.constant 0 : index
    %2 = vector.load %arg2[%c0_1, %c0_2] : memref<16x32xbf16, #tpu.memory_space<vmem>>, vector<16x32xbf16>
    %3 = arith.extf %2 : vector<16x32xbf16> to vector<16x32xf32>
    %4 = arith.addf %1, %3 : vector<16x32xf32>
    %c0_3 = arith.constant 0 : index
    %c0_4 = arith.constant 0 : index
    %5 = vector.load %arg3[%c0_3, %c0_4] : memref<1x32xf32, #tpu.memory_space<vmem>>, vector<1x32xf32>
    %c0_5 = arith.constant 0 : index
    %c0_6 = arith.constant 0 : index
    %6 = vector.load %arg4[%c0_5, %c0_6] : memref<1x32xf32, #tpu.memory_space<vmem>>, vector<1x32xf32>
    %cst = arith.constant dense<0.000000e+00> : vector<16xf32>
    %7 = vector.multi_reduction <add>, %4, %cst [1] : vector<16x32xf32> to vector<16xf32>
    %8 = vector.shape_cast %7 : vector<16xf32> to vector<16x1xf32>
    %cst_7 = arith.constant 3.200000e+01 : f32
    %9 = vector.broadcast %cst_7 : f32 to vector<16x1xf32>
    %10 = arith.divf %8, %9 : vector<16x1xf32>
    %11 = vector.broadcast %10 : vector<16x1xf32> to vector<16x32xf32>
    %12 = arith.subf %4, %11 : vector<16x32xf32>
    %13 = arith.mulf %12, %12 : vector<16x32xf32>
    %cst_8 = arith.constant dense<0.000000e+00> : vector<16xf32>
    %14 = vector.multi_reduction <add>, %13, %cst_8 [1] : vector<16x32xf32> to vector<16xf32>
    %15 = vector.shape_cast %14 : vector<16xf32> to vector<16x1xf32>
    %cst_9 = arith.constant 3.200000e+01 : f32
    %16 = vector.broadcast %cst_9 : f32 to vector<16x1xf32>
    %17 = arith.divf %15, %16 : vector<16x1xf32>
    %cst_10 = arith.constant 9.99999996E-13 : f32
    %18 = vector.broadcast %cst_10 : f32 to vector<16x1xf32>
    %19 = arith.addf %17, %18 : vector<16x1xf32>
    %20 = math.rsqrt %19 : vector<16x1xf32>
    %21 = vector.broadcast %10 : vector<16x1xf32> to vector<16x32xf32>
    %22 = arith.subf %4, %21 : vector<16x32xf32>
    %23 = vector.broadcast %20 : vector<16x1xf32> to vector<16x32xf32>
    %24 = arith.mulf %22, %23 : vector<16x32xf32>
    %25 = vector.broadcast %5 : vector<1x32xf32> to vector<16x32xf32>
    %26 = arith.mulf %24, %25 : vector<16x32xf32>
    %27 = vector.broadcast %6 : vector<1x32xf32> to vector<16x32xf32>
    %28 = arith.addf %26, %27 : vector<16x32xf32>
    %29 = arith.truncf %28 : vector<16x32xf32> to vector<16x32xbf16>
    %c0_11 = arith.constant 0 : index
    %c0_12 = arith.constant 0 : index
    %30 = vector.load %arg5[%c0_11, %c0_12] : memref<16x32xbf16, #tpu.memory_space<vmem>>, vector<16x32xbf16>
    tpu.vector_store %arg5[%c0_11, %c0_12], %29 {strides = array<i32>} : memref<16x32xbf16, #tpu.memory_space<vmem>>, vector<16x32xbf16>,
    return
  }
  func.func @transform_0(%arg0: i32) -> (i32, i32) {
    %c0_i32 = arith.constant 0 : i32
    %c0_i32_0 = arith.constant 0 : i32
    return %arg0, %c0_i32 : i32, i32
  }
  func.func @transform_1(%arg0: i32) -> (i32, i32) {
    %c0_i32 = arith.constant 0 : i32
    %c0_i32_0 = arith.constant 0 : i32
    return %arg0, %c0_i32 : i32, i32
  }
  func.func @transform_2(%arg0: i32) -> (i32, i32) {
    %c0_i32 = arith.constant 0 : i32
    %c0_i32_0 = arith.constant 0 : i32
    %c0_i32_1 = arith.constant 0 : i32
    return %c0_i32, %c0_i32_0 : i32, i32
  }
  func.func @transform_3(%arg0: i32) -> (i32, i32) {
    %c0_i32 = arith.constant 0 : i32
    %c0_i32_0 = arith.constant 0 : i32
    %c0_i32_1 = arith.constant 0 : i32
    return %c0_i32, %c0_i32_0 : i32, i32
  }
  func.func @transform_4(%arg0: i32) -> (i32, i32) {
    %c0_i32 = arith.constant 0 : i32
    %c0_i32_0 = arith.constant 0 : i32
    return %arg0, %c0_i32 : i32, i32
  }
}

</mosaic_0001>

<llo_original>
// kernel: _lambda_.19
$region0: #{_lambda_.19}
  #allocation0 [shape = 'u32[]', space=smem, size = 0x4, offset = 0x4, fixed_abs, tag = 'smem constant byte address 0x4 - core index']
  #allocation1 [shape = 'u32[72,128]{1,0:T(1,128)}', space=vmem, size = 0x9000, scoped, tag = 'internal scratch']
  #allocation2 [shape = 'f32[16,32]{1,0:T(8,128)}', space=vmem, size = 0x2000, scoped, tag = 'scratch operand']
  %s0 = inlined_call_operand.vmem [shape: bf16[16,32], index: 0, kind: input, shape index: {}]
  %s1 = inlined_call_operand.vmem [shape: bf16[32,32], index: 1, kind: input, shape index: {}]
  %s2 = inlined_call_operand.vmem [shape: f32[1,32], index: 2, kind: input, shape index: {}]
  %s3 = inlined_call_operand.vmem [shape: bf16[16,32], index: 3, kind: output, shape index: {}]
  %s4 = sld [smem:[#allocation0]]
  $region30: #{_lambda_.19} parent=0
    _
  %s6 = ssub.s32 1, %s4
  %s7 = scalar_select 0, %s6, %s4
  // Predicated region
  $region2: #{_lambda_.19} parent=0 // pred_check
    _
  $region3: #{_lambda_.19} parent=0 // pred_check_branch
    %9 = sbr.rel (0) target = $region5
  $region4: #{_lambda_.19} parent=0 // pred_region
    _
  $region5: #{_lambda_.19} parent=0 // pred_fallthru
    _
  // Predicated region
  $region6: #{_lambda_.19} parent=0 // pred_check
    _
  $region7: #{_lambda_.19} parent=0 // pred_check_branch
    %11 = sbr.rel (0) target = $region9
  $region8: #{_lambda_.19} parent=0 // pred_region
    _
  $region9: #{_lambda_.19} parent=0 // pred_fallthru
    _
  // Predicated region
  $region10: #{_lambda_.19} parent=0 // pred_check
    _
  $region11: #{_lambda_.19} parent=0 // pred_check_branch
    %13 = sbr.rel (0) target = $region13
  $region12: #{_lambda_.19} parent=0 // pred_region
    _
  $region13: #{_lambda_.19} parent=0 // pred_fallthru
    _
  %p15 = scmp.eq.s32.totalorder 0, 0
  // Predicated region
  $region14: #{_lambda_.19} parent=0 // pred_check
    %p16 = pneg %p15
  $region15: #{_lambda_.19} parent=0 // pred_check_branch
    %18 = sbr.rel (%p16) target = $region17
  $region16: #{_lambda_.19} parent=0 // pred_region
    %vm19 = vcmask 261120
    %20 = vst.msk [vmem:[#allocation2] sm:$0xff] %vm19, 0.0
    %21 = vst.msk [vmem:[#allocation2 + $0x8] sm:$0xff] %vm19, 0.0
  $region17: #{_lambda_.19} parent=0 // pred_fallthru
    _
  %v22 = vld [vmem:[#allocation2] sm:$0xff]
  %v23 = vld [vmem:[#allocation2 + $0x8] sm:$0xff]
  %v24 = vld [vmem:[%s0] sm:$0xf]
  %v25 = vld [vmem:[%s0 + $0x4] sm:$0xf]
  %v26 = vld [vmem:[%s1] sm:$0xf]
  %v27 = vld [vmem:[%s1 + $0x4] sm:$0xf]
  %v28 = vld [vmem:[%s1 + $0x8] sm:$0xf]
  %v29 = vld [vmem:[%s1 + $0xc] sm:$0xf]
  %v32 = vunpack.c.l.b16 %v24
  %v33 = vunpack.c.l.b16 %v25
  %v34 = vpack.c.b16 %v33, %v32
  %v39 = vunpack.c.l.b16 %v26
  %v40 = vunpack.c.l.b16 %v27
  %v41 = vunpack.c.l.b16 %v28
  %v42 = vunpack.c.l.b16 %v29
  %v43 = vpack.c.b16 %v40, %v39
  %v44 = vpack.c.b16 %v42, %v41
  %vm47 = vcmask 261120
  %v49 = vsel %vm47, %v34, 0
  %51 = vmatpush.bf16.msra.mxu0 0
  %52 = vmatpush.bf16.msra.mxu0 0
  %53 = vmatpush.bf16.msra.mxu0 0
  %54 = vmatpush.bf16.msra.mxu0 0
  %55 = vmatpush.bf16.msra.mxu0 0
  %56 = vmatpush.bf16.msra.mxu0 0
  %57 = vmatpush.bf16.msra.mxu0 %v44
  %58 = vmatpush.bf16.msra.mxu0 %v43
  %59 = vmatmul.bf16.gmra.mxu0 %v49
  %v60 = vpop.f32.mrf.mxu0
  %v61 = vadd.f32 0.0, %v60
  %v62 = vpop.f32.mrf.mxu0
  %v63 = vadd.f32 0.0, %v62
  %64 = vdwg.mxu0
  %v65 = vadd.f32 %v22, %v61
  %v66 = vadd.f32 %v23, %v63
  %67 = vst.msk [vmem:[#allocation2] sm:$0xff] %vm47, %v65
  %68 = vst.msk [vmem:[#allocation2 + $0x8] sm:$0xff] %vm47, %v66
  // Predicated region
  $region18: #{_lambda_.19} parent=0 // pred_check
    %p69 = pneg %p15
  $region19: #{_lambda_.19} parent=0 // pred_check_branch
    %71 = sbr.rel (%p69) target = $region21
  $region20: #{_lambda_.19} parent=0 // pred_region
    %v72 = vld [vmem:[#allocation2] sm:$0xff]
    %v73 = vld [vmem:[#allocation2 + $0x8] sm:$0xff]
    %v74 = vld [vmem:[%s2] sm:$0x1]
    %v76 = vperm.slane %v74, 0
    %v78 = vadd.f32 %v72, %v76
    %v79 = vadd.f32 %v73, %v76
    %v80 = vpack.c.bf16 %v78, %v78
    %v81 = vpack.c.bf16 %v79, %v79
    %vm82 = vcmask 257024
    %83 = vst.msk [vmem:[%s3] sm:$0xf] %vm82, %v80
    %84 = vst.msk [vmem:[%s3 + $0x4] sm:$0xf] %vm82, %v81
  $region21: #{_lambda_.19} parent=0 // pred_fallthru
    _
  // Predicated region
  $region22: #{_lambda_.19} parent=0 // pred_check
    _
  $region23: #{_lambda_.19} parent=0 // pred_check_branch
    %86 = sbr.rel (0) target = $region25
  $region24: #{_lambda_.19} parent=0 // pred_region
    _
  $region25: #{_lambda_.19} parent=0 // pred_fallthru
    _
  // Predicated region
  $region26: #{_lambda_.19} parent=0 // pred_check
    _
  $region27: #{_lambda_.19} parent=0 // pred_check_branch
    %88 = sbr.rel (0) target = $region29
  $region28: #{_lambda_.19} parent=0 // pred_region
    _
  $region29: #{_lambda_.19} parent=0 // pred_fallthru
    _

// kernel: _lambda_.16
$region0: #{_lambda_.16}
  #allocation0 [shape = 'u32[]', space=smem, size = 0x4, offset = 0x4, fixed_abs, tag = 'smem constant byte address 0x4 - core index']
  #allocation1 [shape = 'u32[72,128]{1,0:T(1,128)}', space=vmem, size = 0x9000, scoped, tag = 'internal scratch']
  %s0 = inlined_call_operand.vmem [shape: bf16[16,32], index: 0, kind: input, shape index: {}]
  %s1 = inlined_call_operand.vmem [shape: f32[1,32], index: 1, kind: input, shape index: {}]
  %s2 = inlined_call_operand.vmem [shape: f32[1,32], index: 2, kind: input, shape index: {}]
  %s3 = inlined_call_operand.vmem [shape: bf16[16,32], index: 3, kind: output, shape index: {}]
  %s4 = sld [smem:[#allocation0]]
  $region22: #{_lambda_.16} parent=0
    _
  %s6 = ssub.s32 1, %s4
  %s7 = scalar_select 0, %s6, %s4
  // Predicated region
  $region2: #{_lambda_.16} parent=0 // pred_check
    _
  $region3: #{_lambda_.16} parent=0 // pred_check_branch
    %9 = sbr.rel (0) target = $region5
  $region4: #{_lambda_.16} parent=0 // pred_region
    _
  $region5: #{_lambda_.16} parent=0 // pred_fallthru
    _
  // Predicated region
  $region6: #{_lambda_.16} parent=0 // pred_check
    _
  $region7: #{_lambda_.16} parent=0 // pred_check_branch
    %11 = sbr.rel (0) target = $region9
  $region8: #{_lambda_.16} parent=0 // pred_region
    _
  $region9: #{_lambda_.16} parent=0 // pred_fallthru
    _
  // Predicated region
  $region10: #{_lambda_.16} parent=0 // pred_check
    _
  $region11: #{_lambda_.16} parent=0 // pred_check_branch
    %13 = sbr.rel (0) target = $region13
  $region12: #{_lambda_.16} parent=0 // pred_region
    _
  $region13: #{_lambda_.16} parent=0 // pred_fallthru
    _
  %v14 = vld [vmem:[%s0] sm:$0xf]
  %v15 = vld [vmem:[%s0 + $0x4] sm:$0xf]
  %v16 = vld [vmem:[%s1] sm:$0x1]
  %v17 = vld [vmem:[%s2] sm:$0x1]
  %v18 = vunpack.c.l.bf16 %v14
  %v19 = vunpack.c.l.bf16 %v15
  %vm20 = vcmask 261120
  %v21 = vsel %vm20, %v18, 0.0
  %22 = vadd.xlane.f32.xlu0 %v21
  %v23 = vpop.xlane.xlu0 %22
  %v24 = vsel %vm20, %v19, 0.0
  %25 = vadd.xlane.f32.xlu0 %v24
  %v26 = vpop.xlane.xlu0 %25
  %v27 = vrcp.pop 32.0
  %v28 = vmul.f32 32.0, %v27
  %v29 = vsub.f32 1.0, %v28
  %v30 = vmul.f32 %v27, %v29
  %v31 = vadd.f32 %v27, %v30
  %vm32 = vweird.f32 %v27
  %v33 = vsel %vm32, %v27, %v31
  %v34 = vmul.f32 %v23, %v33
  %v35 = vmul.f32 %v26, %v33
  %v36 = vsub.f32 %v18, %v34
  %v37 = vsub.f32 %v19, %v35
  %v38 = vmul.f32 %v36, %v36
  %v39 = vmul.f32 %v37, %v37
  %v40 = vsel %vm20, %v38, 0.0
  %41 = vadd.xlane.f32.xlu0 %v40
  %v42 = vpop.xlane.xlu0 %41
  %v43 = vsel %vm20, %v39, 0.0
  %44 = vadd.xlane.f32.xlu0 %v43
  %v45 = vpop.xlane.xlu0 %44
  %v46 = vmul.f32 %v42, %v33
  %v47 = vmul.f32 %v45, %v33
  %v48 = vadd.f32 %v46, 1e-12
  %v49 = vadd.f32 %v47, 1e-12
  %v50 = vrsqrt.pop %v48
  %v51 = vmul.f32 %v50, %v48
  %v52 = vmul.f32 %v51, %v50
  %v53 = vmul.f32 0.5, %v52
  %v54 = vsub.f32 1.5, %v53
  %v55 = vmul.f32 %v50, %v54
  %vm56 = vweird.f32 %v48
  %vm57 = vweird.f32 %v50
  %vm58 = vmor %vm56, %vm57
  %v59 = vsel %vm58, %v50, %v55
  %v60 = vrsqrt.pop %v49
  %v61 = vmul.f32 %v60, %v49
  %v62 = vmul.f32 %v61, %v60
  %v63 = vmul.f32 0.5, %v62
  %v64 = vsub.f32 1.5, %v63
  %v65 = vmul.f32 %v60, %v64
  %vm66 = vweird.f32 %v49
  %vm67 = vweird.f32 %v60
  %vm68 = vmor %vm66, %vm67
  %v69 = vsel %vm68, %v60, %v65
  %v70 = vmul.f32 %v36, %v59
  %v71 = vmul.f32 %v37, %v69
  %v73 = vperm.slane %v16, 0
  %v75 = vmul.f32 %v70, %v73
  %v76 = vmul.f32 %v71, %v73
  %v78 = vperm.slane %v17, 0
  %v80 = vadd.f32 %v75, %v78
  %v81 = vadd.f32 %v76, %v78
  %v82 = vpack.c.bf16 %v80, %v80
  %v83 = vpack.c.bf16 %v81, %v81
  %vm84 = vcmask 257024
  %85 = vst.msk [vmem:[%s3] sm:$0xf] %vm84, %v82
  %86 = vst.msk [vmem:[%s3 + $0x4] sm:$0xf] %vm84, %v83
  // Predicated region
  $region14: #{_lambda_.16} parent=0 // pred_check
    _
  $region15: #{_lambda_.16} parent=0 // pred_check_branch
    %88 = sbr.rel (0) target = $region17
  $region16: #{_lambda_.16} parent=0 // pred_region
    _
  $region17: #{_lambda_.16} parent=0 // pred_fallthru
    _
  // Predicated region
  $region18: #{_lambda_.16} parent=0 // pred_check
    _
  $region19: #{_lambda_.16} parent=0 // pred_check_branch
    %90 = sbr.rel (0) target = $region21
  $region20: #{_lambda_.16} parent=0 // pred_region
    _
  $region21: #{_lambda_.16} parent=0 // pred_fallthru
    _

// kernel: _lambda_.17
$region0: #{_lambda_.17}
  #allocation0 [shape = 'u32[]', space=smem, size = 0x4, offset = 0x4, fixed_abs, tag = 'smem constant byte address 0x4 - core index']
  #allocation1 [shape = 'u32[72,128]{1,0:T(1,128)}', space=vmem, size = 0x9000, scoped, tag = 'internal scratch']
  #allocation2 [shape = 'f32[16,96]{1,0:T(8,128)}', space=vmem, size = 0x2000, scoped, tag = 'scratch operand']
  %s0 = inlined_call_operand.vmem [shape: bf16[16,32], index: 0, kind: input, shape index: {}]
  %s1 = inlined_call_operand.vmem [shape: bf16[32,96], index: 1, kind: input, shape index: {}]
  %s2 = inlined_call_operand.vmem [shape: f32[1,96], index: 2, kind: input, shape index: {}]
  %s3 = inlined_call_operand.vmem [shape: bf16[16,96], index: 3, kind: output, shape index: {}]
  %s4 = sld [smem:[#allocation0]]
  $region30: #{_lambda_.17} parent=0
    _
  %s6 = ssub.s32 1, %s4
  %s7 = scalar_select 0, %s6, %s4
  // Predicated region
  $region2: #{_lambda_.17} parent=0 // pred_check
    _
  $region3: #{_lambda_.17} parent=0 // pred_check_branch
    %9 = sbr.rel (0) target = $region5
  $region4: #{_lambda_.17} parent=0 // pred_region
    _
  $region5: #{_lambda_.17} parent=0 // pred_fallthru
    _
  // Predicated region
  $region6: #{_lambda_.17} parent=0 // pred_check
    _
  $region7: #{_lambda_.17} parent=0 // pred_check_branch
    %11 = sbr.rel (0) target = $region9
  $region8: #{_lambda_.17} parent=0 // pred_region
    _
  $region9: #{_lambda_.17} parent=0 // pred_fallthru
    _
  // Predicated region
  $region10: #{_lambda_.17} parent=0 // pred_check
    _
  $region11: #{_lambda_.17} parent=0 // pred_check_branch
    %13 = sbr.rel (0) target = $region13
  $region12: #{_lambda_.17} parent=0 // pred_region
    _
  $region13: #{_lambda_.17} parent=0 // pred_fallthru
    _
  %p15 = scmp.eq.s32.totalorder 0, 0
  // Predicated region
  $region14: #{_lambda_.17} parent=0 // pred_check
    %p16 = pneg %p15
  $region15: #{_lambda_.17} parent=0 // pred_check_branch
    %18 = sbr.rel (%p16) target = $region17
  $region16: #{_lambda_.17} parent=0 // pred_region
    %vm19 = vcmask 785408
    %20 = vst.msk [vmem:[#allocation2] sm:$0xff] %vm19, 0.0
    %21 = vst.msk [vmem:[#allocation2 + $0x8] sm:$0xff] %vm19, 0.0
  $region17: #{_lambda_.17} parent=0 // pred_fallthru
    _
  %v22 = vld [vmem:[#allocation2] sm:$0xff]
  %v23 = vld [vmem:[#allocation2 + $0x8] sm:$0xff]
  %v24 = vld [vmem:[%s0] sm:$0xf]
  %v25 = vld [vmem:[%s0 + $0x4] sm:$0xf]
  %v26 = vld [vmem:[%s1] sm:$0xf]
  %v27 = vld [vmem:[%s1 + $0x4] sm:$0xf]
  %v28 = vld [vmem:[%s1 + $0x8] sm:$0xf]
  %v29 = vld [vmem:[%s1 + $0xc] sm:$0xf]
  %v32 = vunpack.c.l.b16 %v24
  %v33 = vunpack.c.l.b16 %v25
  %v34 = vpack.c.b16 %v33, %v32
  %v39 = vunpack.c.l.b16 %v26
  %v40 = vunpack.c.l.b16 %v27
  %v41 = vunpack.c.l.b16 %v28
  %v42 = vunpack.c.l.b16 %v29
  %v43 = vpack.c.b16 %v40, %v39
  %v44 = vpack.c.b16 %v42, %v41
  %vm47 = vcmask 261120
  %v49 = vsel %vm47, %v34, 0
  %51 = vmatpush.bf16.msra.mxu0 0
  %52 = vmatpush.bf16.msra.mxu0 0
  %53 = vmatpush.bf16.msra.mxu0 0
  %54 = vmatpush.bf16.msra.mxu0 0
  %55 = vmatpush.bf16.msra.mxu0 0
  %56 = vmatpush.bf16.msra.mxu0 0
  %57 = vmatpush.bf16.msra.mxu0 %v44
  %58 = vmatpush.bf16.msra.mxu0 %v43
  %59 = vmatmul.bf16.gmra.mxu0 %v49
  %v60 = vpop.f32.mrf.mxu0
  %v61 = vadd.f32 0.0, %v60
  %v62 = vpop.f32.mrf.mxu0
  %v63 = vadd.f32 0.0, %v62
  %64 = vdwg.mxu0
  %v65 = vadd.f32 %v22, %v61
  %v66 = vadd.f32 %v23, %v63
  %vm67 = vcmask 785408
  %68 = vst.msk [vmem:[#allocation2] sm:$0xff] %vm67, %v65
  %69 = vst.msk [vmem:[#allocation2 + $0x8] sm:$0xff] %vm67, %v66
  // Predicated region
  $region18: #{_lambda_.17} parent=0 // pred_check
    %p70 = pneg %p15
  $region19: #{_lambda_.17} parent=0 // pred_check_branch
    %72 = sbr.rel (%p70) target = $region21
  $region20: #{_lambda_.17} parent=0 // pred_region
    %v73 = vld [vmem:[#allocation2] sm:$0xff]
    %v74 = vld [vmem:[#allocation2 + $0x8] sm:$0xff]
    %v75 = vld [vmem:[%s2] sm:$0x1]
    %v77 = vperm.slane %v75, 0
    %v79 = vadd.f32 %v73, %v77
    %v80 = vadd.f32 %v74, %v77
    %v81 = vpack.c.bf16 %v79, %v79
    %v82 = vpack.c.bf16 %v80, %v80
    %vm83 = vcmask 781312
    %84 = vst.msk [vmem:[%s3] sm:$0xf] %vm83, %v81
    %85 = vst.msk [vmem:[%s3 + $0x4] sm:$0xf] %vm83, %v82
  $region21: #{_lambda_.17} parent=0 // pred_fallthru
    _
  // Predicated region
  $region22: #{_lambda_.17} parent=0 // pred_check
    _
  $region23: #{_lambda_.17} parent=0 // pred_check_branch
    %87 = sbr.rel (0) target = $region25
  $region24: #{_lambda_.17} parent=0 // pred_region
    _
  $region25: #{_lambda_.17} parent=0 // pred_fallthru
    _
  // Predicated region
  $region26: #{_lambda_.17} parent=0 // pred_check
    _
  $region27: #{_lambda_.17} parent=0 // pred_check_branch
    %89 = sbr.rel (0) target = $region29
  $region28: #{_lambda_.17} parent=0 // pred_region
    _
  $region29: #{_lambda_.17} parent=0 // pred_fallthru
    _

// kernel: _lambda_.18
$region0: #{_lambda_.18}
  #allocation0 [shape = 'u32[]', space=smem, size = 0x4, offset = 0x4, fixed_abs, tag = 'smem constant byte address 0x4 - core index']
  #allocation1 [shape = 'u32[72,128]{1,0:T(1,128)}', space=vmem, size = 0x9000, scoped, tag = 'internal scratch']
  %s0 = inlined_call_operand.vmem [shape: bf16[2,8,3,32], index: 0, kind: input, shape index: {}]
  %s1 = inlined_call_operand.vmem [shape: f32[2,1,8], index: 1, kind: input, shape index: {}]
  %s2 = inlined_call_operand.vmem [shape: bf16[2,8,32], index: 2, kind: output, shape index: {}]
  %s3 = sld [smem:[#allocation0]]
  $region41: #{_lambda_.18} parent=0
    _
  %s5 = ssub.s32 1, %s3
  %s6 = scalar_select 0, %s5, %s3
  loop: start=0, step=1, limit=4
  $region2: #{_lambda_.18} parent=0 // loop_pre_header
    _
  $region3: #{_lambda_.18} parent=0 // loop_header
    %s8 = sphi 0, %s12
    %p9 = scmp.ge.s32.totalorder %s8, 4
    %s15 = sphi 0, %s27
    %s16 = sphi 0, %s23
    %s17 = sphi 0, %s15
    %s18 = sphi 0, %s16
    %s19 = sphi 0, %s17
    %s20 = sphi 0, %s18
    %s32 = sphi 0, %s34
    %s35 = sphi 0, %s32
    %s36 = sphi 0, %s35
    %s52 = sphi 0, %s36
    %s58 = sphi 0, %s60
    %s61 = sphi 0, %s58
    %s62 = sphi 0, %s61
    %s78 = sphi 0, %s62
    %s86 = sphi 0, %s88
    %s89 = sphi 0, %s86
    %s90 = sphi 0, %s89
    %s106 = sphi 0, %s90
  $region4: #{_lambda_.18} parent=0 // loop_header_branch
    %11 = sbr.rel (%p9) target = $region8
  $region5: #{_lambda_.18} parent=0 // loop_body
    %s13 = ssub.s32 %s8, 1
    %s14 = ssub.s32 %s8, 2
    %s21 = sadd.s32 1, %s16
    %p22 = scmp.ge.s32.totalorder %s21, 1
    %s23 = scalar_select %p22, 0, %s21
    %s24 = sadd.s32 1, %s15
    %s25 = scalar_select %p22, %s24, %s15
    %p26 = scmp.ge.s32.totalorder %s25, 2
    %s27 = scalar_select %p26, 0, %s25
    %s28 = ssub.s32 %s15, %s27
    %s29 = ssub.s32 %s16, %s23
    %s30 = sor.u32 %s28, %s29
    %p31 = scmp.eq.s32.totalorder %s30, 0
    %s33 = sadd.s32 %s32, 1
    %s34 = scalar_select %p31, %s32, %s33
    %p37 = pneg %p31
    %p38 = scmp.eq.s32.totalorder %s8, 1
    %p39 = por %p37, %p38
    %p40 = scmp.ne.s32.totalorder %s32, %s35
    %p41 = scmp.eq.s32.totalorder %s8, 0
    %p42 = por %p40, %p41
    %p43 = scmp.ne.s32.totalorder %s32, %s35
    %p44 = scmp.eq.s32.totalorder %s13, 1
    %p45 = por %p43, %p44
    %p46 = scmp.ne.s32.totalorder %s35, %s36
    %p47 = scmp.eq.s32.totalorder %s13, 0
    %p48 = por %p46, %p47
    %p49 = scmp.ne.s32.totalorder %s35, %s36
    %p50 = scmp.eq.s32.totalorder %s14, 1
    %p51 = por %p49, %p50
    %p53 = scmp.ne.s32.totalorder %s36, %s52
    %p54 = scmp.eq.s32.totalorder %s14, 0
    %p55 = por %p53, %p54
    %s56 = ssub.s32 %s15, %s27
    %p57 = scmp.eq.s32.totalorder %s56, 0
    %s59 = sadd.s32 %s58, 1
    %s60 = scalar_select %p57, %s58, %s59
    %p63 = pneg %p57
    %p64 = scmp.eq.s32.totalorder %s8, 1
    %p65 = por %p63, %p64
    %p66 = scmp.ne.s32.totalorder %s58, %s61
    %p67 = scmp.eq.s32.totalorder %s8, 0
    %p68 = por %p66, %p67
    %p69 = scmp.ne.s32.totalorder %s58, %s61
    %p70 = scmp.eq.s32.totalorder %s13, 1
    %p71 = por %p69, %p70
    %p72 = scmp.ne.s32.totalorder %s61, %s62
    %p73 = scmp.eq.s32.totalorder %s13, 0
    %p74 = por %p72, %p73
    %p75 = scmp.ne.s32.totalorder %s61, %s62
    %p76 = scmp.eq.s32.totalorder %s14, 1
    %p77 = por %p75, %p76
    %p79 = scmp.ne.s32.totalorder %s62, %s78
    %p80 = scmp.eq.s32.totalorder %s14, 0
    %p81 = por %p79, %p80
    %s82 = ssub.s32 %s15, %s27
    %s83 = ssub.s32 %s16, %s23
    %s84 = sor.u32 %s82, %s83
    %p85 = scmp.eq.s32.totalorder %s84, 0
    %s87 = sadd.s32 %s86, 1
    %s88 = scalar_select %p85, %s86, %s87
    %p91 = pneg %p85
    %p92 = scmp.eq.s32.totalorder %s8, 1
    %p93 = por %p91, %p92
    %p94 = scmp.ne.s32.totalorder %s86, %s89
    %p95 = scmp.eq.s32.totalorder %s8, 0
    %p96 = por %p94, %p95
    %p97 = scmp.ne.s32.totalorder %s86, %s89
    %p98 = scmp.eq.s32.totalorder %s13, 1
    %p99 = por %p97, %p98
    %p100 = scmp.ne.s32.totalorder %s89, %s90
    %p101 = scmp.eq.s32.totalorder %s13, 0
    %p102 = por %p100, %p101
    %p103 = scmp.ne.s32.totalorder %s89, %s90
    %p104 = scmp.eq.s32.totalorder %s14, 1
    %p105 = por %p103, %p104
    %p107 = scmp.ne.s32.totalorder %s90, %s106
    %p108 = scmp.eq.s32.totalorder %s14, 0
    %p109 = por %p107, %p108
    %p110 = scmp.le.s32.totalorder 1, %s8
    %p111 = scmp.lt.s32.totalorder %s8, 3
    %p112 = pnand %p110, %p111
    %p113 = pneg %p112
    // Predicated region
    $region9: #{_lambda_.18} parent=5 // pred_check
      _
    $region10: #{_lambda_.18} parent=5 // pred_check_branch
      %115 = sbr.rel (%p112) target = $region12
    $region11: #{_lambda_.18} parent=5 // pred_region
      %s116 = ssub.s32 %s8, 1
    $region12: #{_lambda_.18} parent=5 // pred_fallthru
      _
    %p117 = scmp.lt.s32.totalorder %s8, 2
    // Predicated region
    $region13: #{_lambda_.18} parent=5 // pred_check
      %p118 = pneg %p117
    $region14: #{_lambda_.18} parent=5 // pred_check_branch
      %120 = sbr.rel (%p118) target = $region16
    $region15: #{_lambda_.18} parent=5 // pred_region
      // Predicated region
      $region17: #{_lambda_.18} parent=15 // pred_check
        %p121 = pneg %p42
      $region18: #{_lambda_.18} parent=15 // pred_check_branch
        %123 = sbr.rel (%p121) target = $region20
      $region19: #{_lambda_.18} parent=15 // pred_region
        %p124 = scmp.lt.s32.totalorder %s15, 1
        %s125 = scalar_select %p124, %s15, 1
        %p126 = scmp.lt.s32.totalorder %s16, 0
        %s127 = scalar_select %p126, %s16, 0
        %s128 = smul.addr %s125, 8
        %s129 = sadd.s32 %s127, %s128
        %s130 = smul.addr %s129, 2
        %s131 = scalar_lea.vmem %s0, %s130
      $region20: #{_lambda_.18} parent=15 // pred_fallthru
        _
      // Predicated region
      $region21: #{_lambda_.18} parent=15 // pred_check
        %p132 = pneg %p68
      $region22: #{_lambda_.18} parent=15 // pred_check_branch
        %134 = sbr.rel (%p132) target = $region24
      $region23: #{_lambda_.18} parent=15 // pred_region
        %p135 = scmp.lt.s32.totalorder %s15, 1
        %s136 = scalar_select %p135, %s15, 1
        %s137 = scalar_lea.vmem %s1, %s136
      $region24: #{_lambda_.18} parent=15 // pred_fallthru
        _
    $region16: #{_lambda_.18} parent=5 // pred_fallthru
      _
    %p138 = scmp.le.s32.totalorder 1, %s8
    %p139 = scmp.lt.s32.totalorder %s8, 3
    %p140 = pnand %p138, %p139
    %p141 = pneg %p140
    // Predicated region
    $region25: #{_lambda_.18} parent=5 // pred_check
      _
    $region26: #{_lambda_.18} parent=5 // pred_check_branch
      %143 = sbr.rel (%p140) target = $region28
    $region27: #{_lambda_.18} parent=5 // pred_region
      %s144 = ssub.s32 %s8, 1
      %p145 = scmp.lt.s32.totalorder %s17, 1
      %s146 = scalar_select %p145, %s17, 1
      %p147 = scmp.lt.s32.totalorder %s18, 0
      %s148 = scalar_select %p147, %s18, 0
      %s149 = smul.addr %s146, 8
      %s150 = sadd.s32 %s148, %s149
      %s151 = smul.addr %s150, 2
      %s152 = scalar_lea.vmem %s0, %s151
      %p153 = pneg %p48
      %p154 = pneg %p45
      %p155 = scmp.lt.s32.totalorder %s17, 1
      %s156 = scalar_select %p155, %s17, 1
      %s157 = scalar_lea.vmem %s1, %s156
      %p158 = pneg %p74
      %p159 = pneg %p71
      %p160 = pneg %p102
      %p161 = pneg %p99
      %p162 = scmp.lt.s32.totalorder %s17, 1
      %s163 = scalar_select %p162, %s17, 1
      %p164 = scmp.lt.s32.totalorder %s18, 0
      %s165 = scalar_select %p164, %s18, 0
      %s166 = sadd.s32 %s165, %s163
      %s167 = smul.addr %s166, 4
      %s168 = scalar_lea.vmem %s2, %s167
      %p169 = scmp.lt.s32.totalorder %s17, 1
      %s170 = scalar_select %p169, %s17, 1
      %p171 = scmp.lt.s32.totalorder %s18, 0
      %s172 = scalar_select %p171, %s18, 0
      %s173 = smul.addr %s170, 8
      %s174 = sadd.s32 %s172, %s173
      %s175 = smul.addr %s174, 2
      %s176 = scalar_lea.vmem %s0, %s175
      %p177 = scmp.lt.s32.totalorder %s17, 1
      %s178 = scalar_select %p177, %s17, 1
      %s179 = scalar_lea.vmem %s1, %s178
      %p180 = scmp.lt.s32.totalorder %s17, 1
      %s181 = scalar_select %p180, %s17, 1
      %p182 = scmp.lt.s32.totalorder %s18, 0
      %s183 = scalar_select %p182, %s18, 0
      %s184 = sadd.s32 %s183, %s181
      %s185 = smul.addr %s184, 4
      %s186 = scalar_lea.vmem %s2, %s185
      %v188 = vld [vmem:[%s176] sm:$0x3]
      %v189 = vld [vmem:[%s176 + $0x2] sm:$0x3]
      %v190 = vld [vmem:[%s176 + $0x4] sm:$0x3]
      %v191 = vld [vmem:[%s176 + $0x6] sm:$0x3]
      %v192 = vld [vmem:[%s176 + $0x8] sm:$0x3]
      %v193 = vld [vmem:[%s176 + $0xa] sm:$0x3]
      %v194 = vld [vmem:[%s176 + $0xc] sm:$0x3]
      %v195 = vld [vmem:[%s176 + $0xe] sm:$0x3]
      %v196 = vld [vmem:[%s179] sm:$0x1]
      %v197 = vunpack.c.l.bf16 %v188
      %v198 = vunpack.c.l.bf16 %v189
      %v199 = vunpack.c.l.bf16 %v190
      %v200 = vunpack.c.l.bf16 %v191
      %v201 = vunpack.c.l.bf16 %v192
      %v202 = vunpack.c.l.bf16 %v193
      %v203 = vunpack.c.l.bf16 %v194
      %v204 = vunpack.c.l.bf16 %v195
      %v205 = vmul.f32 %v197, 0.25
      %v206 = vmul.f32 %v198, 0.25
      %v207 = vmul.f32 %v199, 0.25
      %v208 = vmul.f32 %v200, 0.25
      %v209 = vmul.f32 %v201, 0.25
      %v210 = vmul.f32 %v202, 0.25
      %v211 = vmul.f32 %v203, 0.25
      %v212 = vmul.f32 %v204, 0.25
      %v213 = vpack.c.bf16 %v205, %v205
      %v214 = vpack.c.bf16 %v206, %v206
      %v215 = vpack.c.bf16 %v207, %v207
      %v216 = vpack.c.bf16 %v208, %v208
      %v217 = vpack.c.bf16 %v209, %v209
      %v218 = vpack.c.bf16 %v210, %v210
      %v219 = vpack.c.bf16 %v211, %v211
      %v220 = vpack.c.bf16 %v212, %v212
      %v222 = vperm.slane %v196, 0
      %v232 = vunpack.c.l.b16 %v213
      %v233 = vunpack.c.l.b16 %v214
      %v234 = vunpack.c.l.b16 %v215
      %v235 = vunpack.c.l.b16 %v216
      %v236 = vunpack.c.l.b16 %v217
      %v237 = vunpack.c.l.b16 %v218
      %v238 = vunpack.c.l.b16 %v219
      %v239 = vunpack.c.l.b16 %v220
      %v240 = vrot.slane %v233, 7
      %vm241 = vcmask 1041409
      %v242 = vsel %vm241, %v240, %v232
      %v243 = vrot.slane %v234, 6
      %vm244 = vcmask 1042434
      %v245 = vsel %vm244, %v243, %v242
      %v246 = vrot.slane %v235, 5
      %vm247 = vcmask 1043459
      %v248 = vsel %vm247, %v246, %v245
      %v249 = vrot.slane %v236, 4
      %vm250 = vcmask 1044484
      %v251 = vsel %vm250, %v249, %v248
      %v252 = vrot.slane %v237, 3
      %vm253 = vcmask 1045509
      %v254 = vsel %vm253, %v252, %v251
      %v255 = vrot.slane %v238, 2
      %vm256 = vcmask 1046534
      %v257 = vsel %vm256, %v255, %v254
      %v258 = vrot.slane %v239, 1
      %vm259 = vcmask 1047559
      %v260 = vsel %vm259, %v258, %v257
      %v261 = vpack.c.b16 %v260, %v260
      %263 = vst [vmem:[#allocation1] ss:$4 sm:$0xff] %v188
      %v264 = vld.sshfl [vmem:[#allocation1] sm:$0xff pattern:$0x73625140]
      %s267 = scalar_lea.vmem [#allocation1], 32
      %268 = vst [vmem:[%s267] ss:$4 sm:$0xff] %v189
      %v269 = vld.sshfl [vmem:[#allocation1 + $0x20] sm:$0xff pattern:$0x73625140]
      %272 = vst [vmem:[#allocation1] ss:$4 sm:$0xff] %v190
      %v273 = vld.sshfl [vmem:[#allocation1] sm:$0xff pattern:$0x73625140]
      %276 = vst [vmem:[%s267] ss:$4 sm:$0xff] %v191
      %v277 = vld.sshfl [vmem:[#allocation1 + $0x20] sm:$0xff pattern:$0x73625140]
      %280 = vst [vmem:[#allocation1] ss:$4 sm:$0xff] %v192
      %v281 = vld.sshfl [vmem:[#allocation1] sm:$0xff pattern:$0x73625140]
      %284 = vst [vmem:[%s267] ss:$4 sm:$0xff] %v193
      %v285 = vld.sshfl [vmem:[#allocation1 + $0x20] sm:$0xff pattern:$0x73625140]
      %288 = vst [vmem:[#allocation1] ss:$4 sm:$0xff] %v194
      %v289 = vld.sshfl [vmem:[#allocation1] sm:$0xff pattern:$0x73625140]
      %292 = vst [vmem:[%s267] ss:$4 sm:$0xff] %v195
      %v293 = vld.sshfl [vmem:[#allocation1 + $0x20] sm:$0xff pattern:$0x73625140]
      %v295 = vunpack.c.l.b16 %v264
      %v296 = vunpack.c.l.b16 %v269
      %v297 = vunpack.c.l.b16 %v273
      %v298 = vunpack.c.l.b16 %v277
      %v299 = vunpack.c.l.b16 %v281
      %v300 = vunpack.c.l.b16 %v285
      %v301 = vunpack.c.l.b16 %v289
      %v302 = vunpack.c.l.b16 %v293
      %v303 = vrot.slane %v295, 1
      %v304 = vsel %vm241, %v296, %v303
      %v305 = vrot.slane %v297, 7
      %v306 = vsel %vm244, %v305, %v304
      %v307 = vrot.slane %v298, 6
      %v308 = vsel %vm247, %v307, %v306
      %v309 = vrot.slane %v299, 5
      %v310 = vsel %vm250, %v309, %v308
      %v311 = vrot.slane %v300, 4
      %v312 = vsel %vm253, %v311, %v310
      %v313 = vrot.slane %v301, 3
      %v314 = vsel %vm256, %v313, %v312
      %v315 = vrot.slane %v302, 2
      %v316 = vsel %vm259, %v315, %v314
      %v317 = vpack.c.b16 %v316, %v316
      %vm318 = vcmask 130048
      %v320 = vsel %vm318, %v261, 0
      %v323 = vsel %vm318, %v317, 0
      %325 = vmatpush.bf16.xpose.msra.mxu0 0
      %326 = vmatpush.bf16.xpose.msra.mxu0 0
      %327 = vmatpush.bf16.xpose.msra.mxu0 0
      %328 = vmatpush.bf16.xpose.msra.mxu0 0
      %329 = vmatpush.bf16.xpose.msra.mxu0 0
      %330 = vmatpush.bf16.xpose.msra.mxu0 0
      %331 = vmatpush.bf16.xpose.msra.mxu0 0
      %332 = vmatpush.bf16.xpose.msra.mxu0 %v323
      %333 = vmatmul.bf16.gmra.mxu0 %v320
      %v334 = vpop.f32.mrf.mxu0
      %v335 = vadd.f32 %v222, %v334
      %v336 = vpop.f32.mrf.mxu0
      %337 = vdwg.mxu0
      %vm338 = vcmask 64512
      %v339 = vsel %vm338, %v335, -inf
      %340 = vmax.xlane.f32.xlu0 %v339
      %v341 = vpop.xlane.xlu0 %340
      %v342 = vsub.f32 %v335, %v341
      %v343 = vmul.f32 %v342, 1.442695
      %v344 = vpow.pop %v343
      %v345 = vsel %vm338, %v344, 0.0
      %346 = vadd.xlane.f32.xlu0 %v345
      %v347 = vpop.xlane.xlu0 %346
      %v348 = vrcp.pop %v347
      %v349 = vmul.f32 %v344, %v348
      %v350 = vpack.c.bf16 %v349, %v349
      %351 = vst [vmem:[#allocation1] ss:$4 sm:$0xff] %v188
      %v352 = vld.sshfl [vmem:[#allocation1] sm:$0xff pattern:$0x73625140]
      %s354 = scalar_lea.vmem [#allocation1], 32
      %355 = vst [vmem:[%s354] ss:$4 sm:$0xff] %v189
      %v356 = vld.sshfl [vmem:[#allocation1 + $0x20] sm:$0xff pattern:$0x73625140]
      %358 = vst [vmem:[#allocation1] ss:$4 sm:$0xff] %v190
      %v359 = vld.sshfl [vmem:[#allocation1] sm:$0xff pattern:$0x73625140]
      %361 = vst [vmem:[%s354] ss:$4 sm:$0xff] %v191
      %v362 = vld.sshfl [vmem:[#allocation1 + $0x20] sm:$0xff pattern:$0x73625140]
      %364 = vst [vmem:[#allocation1] ss:$4 sm:$0xff] %v192
      %v365 = vld.sshfl [vmem:[#allocation1] sm:$0xff pattern:$0x73625140]
      %367 = vst [vmem:[%s354] ss:$4 sm:$0xff] %v193
      %v368 = vld.sshfl [vmem:[#allocation1 + $0x20] sm:$0xff pattern:$0x73625140]
      %370 = vst [vmem:[#allocation1] ss:$4 sm:$0xff] %v194
      %v371 = vld.sshfl [vmem:[#allocation1] sm:$0xff pattern:$0x73625140]
      %373 = vst [vmem:[%s354] ss:$4 sm:$0xff] %v195
      %v374 = vld.sshfl [vmem:[#allocation1 + $0x20] sm:$0xff pattern:$0x73625140]
      %v376 = vunpack.c.l.b16 %v352
      %v377 = vunpack.c.l.b16 %v356
      %v378 = vunpack.c.l.b16 %v359
      %v379 = vunpack.c.l.b16 %v362
      %v380 = vunpack.c.l.b16 %v365
      %v381 = vunpack.c.l.b16 %v368
      %v382 = vunpack.c.l.b16 %v371
      %v383 = vunpack.c.l.b16 %v374
      %v384 = vrot.slane %v376, 2
      %v385 = vrot.slane %v377, 1
      %v386 = vsel %vm241, %v385, %v384
      %v387 = vsel %vm244, %v378, %v386
      %v388 = vrot.slane %v379, 7
      %v389 = vsel %vm247, %v388, %v387
      %v390 = vrot.slane %v380, 6
      %v391 = vsel %vm250, %v390, %v389
      %v392 = vrot.slane %v381, 5
      %v393 = vsel %vm253, %v392, %v391
      %v394 = vrot.slane %v382, 4
      %v395 = vsel %vm256, %v394, %v393
      %v396 = vrot.slane %v383, 3
      %v397 = vsel %vm259, %v396, %v395
      %v398 = vpack.c.b16 %v397, %v397
      %v400 = vsel %vm338, %v350, 0
      %vm402 = vcmask 1043456
      %v404 = vsel %vm402, %v398, 0
      %406 = vmatpush.bf16.msra.mxu0 0
      %407 = vmatpush.bf16.msra.mxu0 0
      %408 = vmatpush.bf16.msra.mxu0 0
      %409 = vmatpush.bf16.msra.mxu0 0
      %410 = vmatpush.bf16.msra.mxu0 0
      %411 = vmatpush.bf16.msra.mxu0 0
      %412 = vmatpush.bf16.msra.mxu0 0
      %413 = vmatpush.bf16.msra.mxu0 %v404
      %414 = vmatmul.bf16.gmra.mxu0 %v400
      %v415 = vpop.f32.mrf.mxu0
      %v416 = vadd.f32 0.0, %v415
      %v417 = vpop.f32.mrf.mxu0
      %418 = vdwg.mxu0
      %v419 = vpack.c.bf16 %v416, %v416
      %vm420 = vcmask 125952
      %421 = vst.msk [vmem:[%s186] sm:$0xf] %vm420, %v419
      %422 = vrot.lane.b32.xlu0 %v261, 112
      %v423 = vpop.permute.xlu0 %422
      %424 = vst [vmem:[#allocation1] ss:$4 sm:$0xff] %v188
      %v425 = vld.sshfl [vmem:[#allocation1] sm:$0xff pattern:$0x73625140]
      %s427 = scalar_lea.vmem [#allocation1], 32
      %428 = vst [vmem:[%s427] ss:$4 sm:$0xff] %v189
      %v429 = vld.sshfl [vmem:[#allocation1 + $0x20] sm:$0xff pattern:$0x73625140]
      %431 = vst [vmem:[#allocation1] ss:$4 sm:$0xff] %v190
      %v432 = vld.sshfl [vmem:[#allocation1] sm:$0xff pattern:$0x73625140]
      %434 = vst [vmem:[%s427] ss:$4 sm:$0xff] %v191
      %v435 = vld.sshfl [vmem:[#allocation1 + $0x20] sm:$0xff pattern:$0x73625140]
      %437 = vst [vmem:[#allocation1] ss:$4 sm:$0xff] %v192
      %v438 = vld.sshfl [vmem:[#allocation1] sm:$0xff pattern:$0x73625140]
      %440 = vst [vmem:[%s427] ss:$4 sm:$0xff] %v193
      %v441 = vld.sshfl [vmem:[#allocation1 + $0x20] sm:$0xff pattern:$0x73625140]
      %443 = vst [vmem:[#allocation1] ss:$4 sm:$0xff] %v194
      %v444 = vld.sshfl [vmem:[#allocation1] sm:$0xff pattern:$0x73625140]
      %446 = vst [vmem:[%s427] ss:$4 sm:$0xff] %v195
      %v447 = vld.sshfl [vmem:[#allocation1 + $0x20] sm:$0xff pattern:$0x73625140]
      %v449 = vunpack.c.l.b16 %v425
      %v450 = vunpack.c.l.b16 %v429
      %v451 = vunpack.c.l.b16 %v432
      %v452 = vunpack.c.l.b16 %v435
      %v453 = vunpack.c.l.b16 %v438
      %v454 = vunpack.c.l.b16 %v441
      %v455 = vunpack.c.l.b16 %v444
      %v456 = vunpack.c.l.b16 %v447
      %v457 = vrot.slane %v449, 1
      %v458 = vsel %vm241, %v450, %v457
      %v459 = vrot.slane %v451, 7
      %v460 = vsel %vm244, %v459, %v458
      %v461 = vrot.slane %v452, 6
      %v462 = vsel %vm247, %v461, %v460
      %v463 = vrot.slane %v453, 5
      %v464 = vsel %vm250, %v463, %v462
      %v465 = vrot.slane %v454, 4
      %v466 = vsel %vm253, %v465, %v464
      %v467 = vrot.slane %v455, 3
      %v468 = vsel %vm256, %v467, %v466
      %v469 = vrot.slane %v456, 2
      %v470 = vsel %vm259, %v469, %v468
      %v471 = vpack.c.b16 %v470, %v470
      %472 = vrot.lane.b32.xlu0 %v471, 112
      %v473 = vpop.permute.xlu0 %472
      %v475 = vsel %vm318, %v423, 0
      %v478 = vsel %vm318, %v473, 0
      %480 = vmatpush.bf16.xpose.msra.mxu0 0
      %481 = vmatpush.bf16.xpose.msra.mxu0 0
      %482 = vmatpush.bf16.xpose.msra.mxu0 0
      %483 = vmatpush.bf16.xpose.msra.mxu0 0
      %484 = vmatpush.bf16.xpose.msra.mxu0 0
      %485 = vmatpush.bf16.xpose.msra.mxu0 0
      %486 = vmatpush.bf16.xpose.msra.mxu0 0
      %487 = vmatpush.bf16.xpose.msra.mxu0 %v478
      %488 = vmatmul.bf16.gmra.mxu0 %v475
      %v489 = vpop.f32.mrf.mxu0
      %v490 = vadd.f32 %v222, %v489
      %v491 = vpop.f32.mrf.mxu0
      %492 = vdwg.mxu0
      %v493 = vsel %vm338, %v490, -inf
      %494 = vmax.xlane.f32.xlu0 %v493
      %v495 = vpop.xlane.xlu0 %494
      %v496 = vsub.f32 %v490, %v495
      %v497 = vmul.f32 %v496, 1.442695
      %v498 = vpow.pop %v497
      %v499 = vsel %vm338, %v498, 0.0
      %500 = vadd.xlane.f32.xlu0 %v499
      %v501 = vpop.xlane.xlu0 %500
      %v502 = vrcp.pop %v501
      %v503 = vmul.f32 %v498, %v502
      %v504 = vpack.c.bf16 %v503, %v503
      %505 = vst [vmem:[#allocation1] ss:$4 sm:$0xff] %v188
      %v506 = vld.sshfl [vmem:[#allocation1] sm:$0xff pattern:$0x73625140]
      %s508 = scalar_lea.vmem [#allocation1], 32
      %509 = vst [vmem:[%s508] ss:$4 sm:$0xff] %v189
      %v510 = vld.sshfl [vmem:[#allocation1 + $0x20] sm:$0xff pattern:$0x73625140]
      %512 = vst [vmem:[#allocation1] ss:$4 sm:$0xff] %v190
      %v513 = vld.sshfl [vmem:[#allocation1] sm:$0xff pattern:$0x73625140]
      %515 = vst [vmem:[%s508] ss:$4 sm:$0xff] %v191
      %v516 = vld.sshfl [vmem:[#allocation1 + $0x20] sm:$0xff pattern:$0x73625140]
      %518 = vst [vmem:[#allocation1] ss:$4 sm:$0xff] %v192
      %v519 = vld.sshfl [vmem:[#allocation1] sm:$0xff pattern:$0x73625140]
      %521 = vst [vmem:[%s508] ss:$4 sm:$0xff] %v193
      %v522 = vld.sshfl [vmem:[#allocation1 + $0x20] sm:$0xff pattern:$0x73625140]
      %524 = vst [vmem:[#allocation1] ss:$4 sm:$0xff] %v194
      %v525 = vld.sshfl [vmem:[#allocation1] sm:$0xff pattern:$0x73625140]
      %527 = vst [vmem:[%s508] ss:$4 sm:$0xff] %v195
      %v528 = vld.sshfl [vmem:[#allocation1 + $0x20] sm:$0xff pattern:$0x73625140]
      %v530 = vunpack.c.l.b16 %v506
      %v531 = vunpack.c.l.b16 %v510
      %v532 = vunpack.c.l.b16 %v513
      %v533 = vunpack.c.l.b16 %v516
      %v534 = vunpack.c.l.b16 %v519
      %v535 = vunpack.c.l.b16 %v522
      %v536 = vunpack.c.l.b16 %v525
      %v537 = vunpack.c.l.b16 %v528
      %v538 = vrot.slane %v530, 2
      %v539 = vrot.slane %v531, 1
      %v540 = vsel %vm241, %v539, %v538
      %v541 = vsel %vm244, %v532, %v540
      %v542 = vrot.slane %v533, 7
      %v543 = vsel %vm247, %v542, %v541
      %v544 = vrot.slane %v534, 6
      %v545 = vsel %vm250, %v544, %v543
      %v546 = vrot.slane %v535, 5
      %v547 = vsel %vm253, %v546, %v545
      %v548 = vrot.slane %v536, 4
      %v549 = vsel %vm256, %v548, %v547
      %v550 = vrot.slane %v537, 3
      %v551 = vsel %vm259, %v550, %v549
      %v552 = vpack.c.b16 %v551, %v551
      %553 = vrot.lane.b32.xlu0 %v552, 112
      %v554 = vpop.permute.xlu0 %553
      %v556 = vsel %vm338, %v504, 0
      %v559 = vsel %vm402, %v554, 0
      %561 = vmatpush.bf16.msra.mxu0 0
      %562 = vmatpush.bf16.msra.mxu0 0
      %563 = vmatpush.bf16.msra.mxu0 0
      %564 = vmatpush.bf16.msra.mxu0 0
      %565 = vmatpush.bf16.msra.mxu0 0
      %566 = vmatpush.bf16.msra.mxu0 0
      %567 = vmatpush.bf16.msra.mxu0 0
      %568 = vmatpush.bf16.msra.mxu0 %v559
      %569 = vmatmul.bf16.gmra.mxu0 %v556
      %v570 = vpop.f32.mrf.mxu0
      %v571 = vadd.f32 0.0, %v570
      %v572 = vpop.f32.mrf.mxu0
      %573 = vdwg.mxu0
      %v574 = vpack.c.bf16 %v571, %v571
      %576 = vrot.lane.b32.xlu0 %v574, 16
      %v577 = vpop.permute.xlu0 %576
      %vm579 = vcmask 257152
      %580 = vst.msk [vmem:[%s186] sm:$0xf] %vm579, %v577
      %p581 = scmp.lt.s32.totalorder %s17, 1
      %s582 = scalar_select %p581, %s17, 1
      %p583 = scmp.lt.s32.totalorder %s18, 0
      %s584 = scalar_select %p583, %s18, 0
      %s585 = sadd.s32 %s584, %s582
      %s586 = smul.addr %s585, 4
      %s587 = scalar_lea.vmem %s2, %s586
      // Predicated region
      $region29: #{_lambda_.18} parent=27 // pred_check
        %p588 = pneg %p99
      $region30: #{_lambda_.18} parent=27 // pred_check_branch
        %590 = sbr.rel (%p588) target = $region32
      $region31: #{_lambda_.18} parent=27 // pred_region
        _
      $region32: #{_lambda_.18} parent=27 // pred_fallthru
        _
    $region28: #{_lambda_.18} parent=5 // pred_fallthru
      _
    %p591 = scmp.le.s32.totalorder 2, %s8
    // Predicated region
    $region33: #{_lambda_.18} parent=5 // pred_check
      %p592 = pneg %p591
    $region34: #{_lambda_.18} parent=5 // pred_check_branch
      %594 = sbr.rel (%p592) target = $region36
    $region35: #{_lambda_.18} parent=5 // pred_region
      %s595 = ssub.s32 %s8, 2
      // Predicated region
      $region37: #{_lambda_.18} parent=35 // pred_check
        %p596 = pneg %p105
      $region38: #{_lambda_.18} parent=35 // pred_check_branch
        %598 = sbr.rel (%p596) target = $region40
      $region39: #{_lambda_.18} parent=35 // pred_region
        %p599 = scmp.lt.s32.totalorder %s19, 1
        %s600 = scalar_select %p599, %s19, 1
        %p601 = scmp.lt.s32.totalorder %s20, 0
        %s602 = scalar_select %p601, %s20, 0
        %s603 = sadd.s32 %s602, %s600
        %s604 = smul.addr %s603, 4
        %s605 = scalar_lea.vmem %s2, %s604
      $region40: #{_lambda_.18} parent=35 // pred_fallthru
        _
    $region36: #{_lambda_.18} parent=5 // pred_fallthru
      _
  $region6: #{_lambda_.18} parent=0 // loop_footer
    %s12 = sadd.s32 1, %s8
  $region7: #{_lambda_.18} parent=0 // loop_footer_branch
    %7 = sbr.rel target = $region3
  $region8: #{_lambda_.18} parent=0 // loop_exit
    _

// kernel: _lambda_.21
$region0: #{_lambda_.21}
  #allocation0 [shape = 'u32[]', space=smem, size = 0x4, offset = 0x4, fixed_abs, tag = 'smem constant byte address 0x4 - core index']
  #allocation1 [shape = 'u32[72,128]{1,0:T(1,128)}', space=vmem, size = 0x9000, scoped, tag = 'internal scratch']
  #allocation2 [shape = 'f32[16,64]{1,0:T(8,128)}', space=vmem, size = 0x2000, scoped, tag = 'scratch operand']
  %s0 = inlined_call_operand.vmem [shape: bf16[16,32], index: 0, kind: input, shape index: {}]
  %s1 = inlined_call_operand.vmem [shape: bf16[32,64], index: 1, kind: input, shape index: {}]
  %s2 = inlined_call_operand.vmem [shape: f32[1,64], index: 2, kind: input, shape index: {}]
  %s3 = inlined_call_operand.vmem [shape: bf16[16,64], index: 3, kind: output, shape index: {}]
  %s4 = sld [smem:[#allocation0]]
  $region30: #{_lambda_.21} parent=0
    _
  %s6 = ssub.s32 1, %s4
  %s7 = scalar_select 0, %s6, %s4
  // Predicated region
  $region2: #{_lambda_.21} parent=0 // pred_check
    _
  $region3: #{_lambda_.21} parent=0 // pred_check_branch
    %9 = sbr.rel (0) target = $region5
  $region4: #{_lambda_.21} parent=0 // pred_region
    _
  $region5: #{_lambda_.21} parent=0 // pred_fallthru
    _
  // Predicated region
  $region6: #{_lambda_.21} parent=0 // pred_check
    _
  $region7: #{_lambda_.21} parent=0 // pred_check_branch
    %11 = sbr.rel (0) target = $region9
  $region8: #{_lambda_.21} parent=0 // pred_region
    _
  $region9: #{_lambda_.21} parent=0 // pred_fallthru
    _
  // Predicated region
  $region10: #{_lambda_.21} parent=0 // pred_check
    _
  $region11: #{_lambda_.21} parent=0 // pred_check_branch
    %13 = sbr.rel (0) target = $region13
  $region12: #{_lambda_.21} parent=0 // pred_region
    _
  $region13: #{_lambda_.21} parent=0 // pred_fallthru
    _
  %p15 = scmp.eq.s32.totalorder 0, 0
  // Predicated region
  $region14: #{_lambda_.21} parent=0 // pred_check
    %p16 = pneg %p15
  $region15: #{_lambda_.21} parent=0 // pred_check_branch
    %18 = sbr.rel (%p16) target = $region17
  $region16: #{_lambda_.21} parent=0 // pred_region
    %vm19 = vcmask 523264
    %20 = vst.msk [vmem:[#allocation2] sm:$0xff] %vm19, 0.0
    %21 = vst.msk [vmem:[#allocation2 + $0x8] sm:$0xff] %vm19, 0.0
  $region17: #{_lambda_.21} parent=0 // pred_fallthru
    _
  %v22 = vld [vmem:[#allocation2] sm:$0xff]
  %v23 = vld [vmem:[#allocation2 + $0x8] sm:$0xff]
  %v24 = vld [vmem:[%s0] sm:$0xf]
  %v25 = vld [vmem:[%s0 + $0x4] sm:$0xf]
  %v26 = vld [vmem:[%s1] sm:$0xf]
  %v27 = vld [vmem:[%s1 + $0x4] sm:$0xf]
  %v28 = vld [vmem:[%s1 + $0x8] sm:$0xf]
  %v29 = vld [vmem:[%s1 + $0xc] sm:$0xf]
  %v32 = vunpack.c.l.b16 %v24
  %v33 = vunpack.c.l.b16 %v25
  %v34 = vpack.c.b16 %v33, %v32
  %v39 = vunpack.c.l.b16 %v26
  %v40 = vunpack.c.l.b16 %v27
  %v41 = vunpack.c.l.b16 %v28
  %v42 = vunpack.c.l.b16 %v29
  %v43 = vpack.c.b16 %v40, %v39
  %v44 = vpack.c.b16 %v42, %v41
  %vm47 = vcmask 261120
  %v49 = vsel %vm47, %v34, 0
  %51 = vmatpush.bf16.msra.mxu0 0
  %52 = vmatpush.bf16.msra.mxu0 0
  %53 = vmatpush.bf16.msra.mxu0 0
  %54 = vmatpush.bf16.msra.mxu0 0
  %55 = vmatpush.bf16.msra.mxu0 0
  %56 = vmatpush.bf16.msra.mxu0 0
  %57 = vmatpush.bf16.msra.mxu0 %v44
  %58 = vmatpush.bf16.msra.mxu0 %v43
  %59 = vmatmul.bf16.gmra.mxu0 %v49
  %v60 = vpop.f32.mrf.mxu0
  %v61 = vadd.f32 0.0, %v60
  %v62 = vpop.f32.mrf.mxu0
  %v63 = vadd.f32 0.0, %v62
  %64 = vdwg.mxu0
  %v65 = vadd.f32 %v22, %v61
  %v66 = vadd.f32 %v23, %v63
  %vm67 = vcmask 523264
  %68 = vst.msk [vmem:[#allocation2] sm:$0xff] %vm67, %v65
  %69 = vst.msk [vmem:[#allocation2 + $0x8] sm:$0xff] %vm67, %v66
  // Predicated region
  $region18: #{_lambda_.21} parent=0 // pred_check
    %p70 = pneg %p15
  $region19: #{_lambda_.21} parent=0 // pred_check_branch
    %72 = sbr.rel (%p70) target = $region21
  $region20: #{_lambda_.21} parent=0 // pred_region
    %v73 = vld [vmem:[#allocation2] sm:$0xff]
    %v74 = vld [vmem:[#allocation2 + $0x8] sm:$0xff]
    %v75 = vld [vmem:[%s2] sm:$0x1]
    %v77 = vperm.slane %v75, 0
    %v79 = vadd.f32 %v73, %v77
    %v80 = vadd.f32 %v74, %v77
    %v81 = vmul.f32 %v79, 0.5
    %v82 = vmul.f32 %v80, 0.5
    %v83 = vmul.f32 %v79, 0.044715
    %v84 = vmul.f32 %v80, 0.044715
    %v85 = vmul.f32 %v83, %v79
    %v86 = vmul.f32 %v84, %v80
    %v87 = vmul.f32 %v85, %v79
    %v88 = vmul.f32 %v86, %v80
    %v89 = vadd.f32 %v79, %v87
    %v90 = vadd.f32 %v80, %v88
    %v91 = vmul.f32 %v89, 0.7978846
    %v92 = vmul.f32 %v90, 0.7978846
    %v93 = vtanh.pop %v91
    %v94 = vtanh.pop %v92
    %v95 = vadd.f32 %v93, 1.0
    %v96 = vadd.f32 %v94, 1.0
    %v97 = vmul.f32 %v81, %v95
    %v98 = vmul.f32 %v82, %v96
    %v99 = vpack.c.bf16 %v97, %v97
    %v100 = vpack.c.bf16 %v98, %v98
    %vm101 = vcmask 519168
    %102 = vst.msk [vmem:[%s3] sm:$0xf] %vm101, %v99
    %103 = vst.msk [vmem:[%s3 + $0x4] sm:$0xf] %vm101, %v100
  $region21: #{_lambda_.21} parent=0 // pred_fallthru
    _
  // Predicated region
  $region22: #{_lambda_.21} parent=0 // pred_check
    _
  $region23: #{_lambda_.21} parent=0 // pred_check_branch
    %105 = sbr.rel (0) target = $region25
  $region24: #{_lambda_.21} parent=0 // pred_region
    _
  $region25: #{_lambda_.21} parent=0 // pred_fallthru
    _
  // Predicated region
  $region26: #{_lambda_.21} parent=0 // pred_check
    _
  $region27: #{_lambda_.21} parent=0 // pred_check_branch
    %107 = sbr.rel (0) target = $region29
  $region28: #{_lambda_.21} parent=0 // pred_region
    _
  $region29: #{_lambda_.21} parent=0 // pred_fallthru
    _

// kernel: _lambda_.22
$region0: #{_lambda_.22}
  #allocation0 [shape = 'u32[]', space=smem, size = 0x4, offset = 0x4, fixed_abs, tag = 'smem constant byte address 0x4 - core index']
  #allocation1 [shape = 'u32[72,128]{1,0:T(1,128)}', space=vmem, size = 0x9000, scoped, tag = 'internal scratch']
  #allocation2 [shape = 'f32[16,32]{1,0:T(8,128)}', space=vmem, size = 0x2000, scoped, tag = 'scratch operand']
  %s0 = inlined_call_operand.vmem [shape: bf16[16,64], index: 0, kind: input, shape index: {}]
  %s1 = inlined_call_operand.vmem [shape: bf16[64,32], index: 1, kind: input, shape index: {}]
  %s2 = inlined_call_operand.vmem [shape: f32[1,32], index: 2, kind: input, shape index: {}]
  %s3 = inlined_call_operand.vmem [shape: bf16[16,32], index: 3, kind: output, shape index: {}]
  %s4 = sld [smem:[#allocation0]]
  $region30: #{_lambda_.22} parent=0
    _
  %s6 = ssub.s32 1, %s4
  %s7 = scalar_select 0, %s6, %s4
  // Predicated region
  $region2: #{_lambda_.22} parent=0 // pred_check
    _
  $region3: #{_lambda_.22} parent=0 // pred_check_branch
    %9 = sbr.rel (0) target = $region5
  $region4: #{_lambda_.22} parent=0 // pred_region
    _
  $region5: #{_lambda_.22} parent=0 // pred_fallthru
    _
  // Predicated region
  $region6: #{_lambda_.22} parent=0 // pred_check
    _
  $region7: #{_lambda_.22} parent=0 // pred_check_branch
    %11 = sbr.rel (0) target = $region9
  $region8: #{_lambda_.22} parent=0 // pred_region
    _
  $region9: #{_lambda_.22} parent=0 // pred_fallthru
    _
  // Predicated region
  $region10: #{_lambda_.22} parent=0 // pred_check
    _
  $region11: #{_lambda_.22} parent=0 // pred_check_branch
    %13 = sbr.rel (0) target = $region13
  $region12: #{_lambda_.22} parent=0 // pred_region
    _
  $region13: #{_lambda_.22} parent=0 // pred_fallthru
    _
  %p15 = scmp.eq.s32.totalorder 0, 0
  // Predicated region
  $region14: #{_lambda_.22} parent=0 // pred_check
    %p16 = pneg %p15
  $region15: #{_lambda_.22} parent=0 // pred_check_branch
    %18 = sbr.rel (%p16) target = $region17
  $region16: #{_lambda_.22} parent=0 // pred_region
    %vm19 = vcmask 261120
    %20 = vst.msk [vmem:[#allocation2] sm:$0xff] %vm19, 0.0
    %21 = vst.msk [vmem:[#allocation2 + $0x8] sm:$0xff] %vm19, 0.0
  $region17: #{_lambda_.22} parent=0 // pred_fallthru
    _
  %v22 = vld [vmem:[#allocation2] sm:$0xff]
  %v23 = vld [vmem:[#allocation2 + $0x8] sm:$0xff]
  %v24 = vld [vmem:[%s0] sm:$0xf]
  %v25 = vld [vmem:[%s0 + $0x4] sm:$0xf]
  %v26 = vld [vmem:[%s1] sm:$0xf]
  %v27 = vld [vmem:[%s1 + $0x4] sm:$0xf]
  %v28 = vld [vmem:[%s1 + $0x8] sm:$0xf]
  %v29 = vld [vmem:[%s1 + $0xc] sm:$0xf]
  %v30 = vld [vmem:[%s1 + $0x10] sm:$0xf]
  %v31 = vld [vmem:[%s1 + $0x14] sm:$0xf]
  %v32 = vld [vmem:[%s1 + $0x18] sm:$0xf]
  %v33 = vld [vmem:[%s1 + $0x1c] sm:$0xf]
  %v36 = vunpack.c.l.b16 %v24
  %v37 = vunpack.c.l.b16 %v25
  %v38 = vpack.c.b16 %v37, %v36
  %v47 = vunpack.c.l.b16 %v26
  %v48 = vunpack.c.l.b16 %v27
  %v49 = vunpack.c.l.b16 %v28
  %v50 = vunpack.c.l.b16 %v29
  %v51 = vunpack.c.l.b16 %v30
  %v52 = vunpack.c.l.b16 %v31
  %v53 = vunpack.c.l.b16 %v32
  %v54 = vunpack.c.l.b16 %v33
  %v55 = vpack.c.b16 %v48, %v47
  %v56 = vpack.c.b16 %v50, %v49
  %v57 = vpack.c.b16 %v52, %v51
  %v58 = vpack.c.b16 %v54, %v53
  %vm63 = vcmask 523264
  %v65 = vsel %vm63, %v38, 0
  %67 = vmatpush.bf16.msra.mxu0 0
  %68 = vmatpush.bf16.msra.mxu0 0
  %69 = vmatpush.bf16.msra.mxu0 0
  %70 = vmatpush.bf16.msra.mxu0 0
  %71 = vmatpush.bf16.msra.mxu0 %v58
  %72 = vmatpush.bf16.msra.mxu0 %v57
  %73 = vmatpush.bf16.msra.mxu0 %v56
  %74 = vmatpush.bf16.msra.mxu0 %v55
  %75 = vmatmul.bf16.gmra.mxu0 %v65
  %v76 = vpop.f32.mrf.mxu0
  %v77 = vadd.f32 0.0, %v76
  %v78 = vpop.f32.mrf.mxu0
  %v79 = vadd.f32 0.0, %v78
  %80 = vdwg.mxu0
  %v81 = vadd.f32 %v22, %v77
  %v82 = vadd.f32 %v23, %v79
  %vm83 = vcmask 261120
  %84 = vst.msk [vmem:[#allocation2] sm:$0xff] %vm83, %v81
  %85 = vst.msk [vmem:[#allocation2 + $0x8] sm:$0xff] %vm83, %v82
  // Predicated region
  $region18: #{_lambda_.22} parent=0 // pred_check
    %p86 = pneg %p15
  $region19: #{_lambda_.22} parent=0 // pred_check_branch
    %88 = sbr.rel (%p86) target = $region21
  $region20: #{_lambda_.22} parent=0 // pred_region
    %v89 = vld [vmem:[#allocation2] sm:$0xff]
    %v90 = vld [vmem:[#allocation2 + $0x8] sm:$0xff]
    %v91 = vld [vmem:[%s2] sm:$0x1]
    %v93 = vperm.slane %v91, 0
    %v95 = vadd.f32 %v89, %v93
    %v96 = vadd.f32 %v90, %v93
    %v97 = vpack.c.bf16 %v95, %v95
    %v98 = vpack.c.bf16 %v96, %v96
    %vm99 = vcmask 257024
    %100 = vst.msk [vmem:[%s3] sm:$0xf] %vm99, %v97
    %101 = vst.msk [vmem:[%s3 + $0x4] sm:$0xf] %vm99, %v98
  $region21: #{_lambda_.22} parent=0 // pred_fallthru
    _
  // Predicated region
  $region22: #{_lambda_.22} parent=0 // pred_check
    _
  $region23: #{_lambda_.22} parent=0 // pred_check_branch
    %103 = sbr.rel (0) target = $region25
  $region24: #{_lambda_.22} parent=0 // pred_region
    _
  $region25: #{_lambda_.22} parent=0 // pred_fallthru
    _
  // Predicated region
  $region26: #{_lambda_.22} parent=0 // pred_check
    _
  $region27: #{_lambda_.22} parent=0 // pred_check_branch
    %105 = sbr.rel (0) target = $region29
  $region28: #{_lambda_.22} parent=0 // pred_region
    _
  $region29: #{_lambda_.22} parent=0 // pred_fallthru
    _

// kernel: _lambda_.20
$region0: #{_lambda_.20}
  #allocation0 [shape = 'u32[]', space=smem, size = 0x4, offset = 0x4, fixed_abs, tag = 'smem constant byte address 0x4 - core index']
  #allocation1 [shape = 'u32[72,128]{1,0:T(1,128)}', space=vmem, size = 0x9000, scoped, tag = 'internal scratch']
  %s0 = inlined_call_operand.vmem [shape: bf16[16,32], index: 0, kind: input, shape index: {}]
  %s1 = inlined_call_operand.vmem [shape: bf16[16,32], index: 1, kind: input, shape index: {}]
  %s2 = inlined_call_operand.vmem [shape: f32[1,32], index: 2, kind: input, shape index: {}]
  %s3 = inlined_call_operand.vmem [shape: f32[1,32], index: 3, kind: input, shape index: {}]
  %s4 = inlined_call_operand.vmem [shape: bf16[16,32], index: 4, kind: output, shape index: {}]
  %s5 = sld [smem:[#allocation0]]
  $region26: #{_lambda_.20} parent=0
    _
  %s7 = ssub.s32 1, %s5
  %s8 = scalar_select 0, %s7, %s5
  // Predicated region
  $region2: #{_lambda_.20} parent=0 // pred_check
    _
  $region3: #{_lambda_.20} parent=0 // pred_check_branch
    %10 = sbr.rel (0) target = $region5
  $region4: #{_lambda_.20} parent=0 // pred_region
    _
  $region5: #{_lambda_.20} parent=0 // pred_fallthru
    _
  // Predicated region
  $region6: #{_lambda_.20} parent=0 // pred_check
    _
  $region7: #{_lambda_.20} parent=0 // pred_check_branch
    %12 = sbr.rel (0) target = $region9
  $region8: #{_lambda_.20} parent=0 // pred_region
    _
  $region9: #{_lambda_.20} parent=0 // pred_fallthru
    _
  // Predicated region
  $region10: #{_lambda_.20} parent=0 // pred_check
    _
  $region11: #{_lambda_.20} parent=0 // pred_check_branch
    %14 = sbr.rel (0) target = $region13
  $region12: #{_lambda_.20} parent=0 // pred_region
    _
  $region13: #{_lambda_.20} parent=0 // pred_fallthru
    _
  // Predicated region
  $region14: #{_lambda_.20} parent=0 // pred_check
    _
  $region15: #{_lambda_.20} parent=0 // pred_check_branch
    %16 = sbr.rel (0) target = $region17
  $region16: #{_lambda_.20} parent=0 // pred_region
    _
  $region17: #{_lambda_.20} parent=0 // pred_fallthru
    _
  %v17 = vld [vmem:[%s0] sm:$0xf]
  %v18 = vld [vmem:[%s0 + $0x4] sm:$0xf]
  %v19 = vunpack.c.l.bf16 %v17
  %v20 = vunpack.c.l.bf16 %v18
  %v21 = vld [vmem:[%s1] sm:$0xf]
  %v22 = vld [vmem:[%s1 + $0x4] sm:$0xf]
  %v23 = vunpack.c.l.bf16 %v21
  %v24 = vunpack.c.l.bf16 %v22
  %v25 = vadd.f32 %v19, %v23
  %v26 = vadd.f32 %v20, %v24
  %v27 = vld [vmem:[%s2] sm:$0x1]
  %v28 = vld [vmem:[%s3] sm:$0x1]
  %vm29 = vcmask 261120
  %v30 = vsel %vm29, %v25, 0.0
  %31 = vadd.xlane.f32.xlu0 %v30
  %v32 = vpop.xlane.xlu0 %31
  %v33 = vsel %vm29, %v26, 0.0
  %34 = vadd.xlane.f32.xlu0 %v33
  %v35 = vpop.xlane.xlu0 %34
  %v36 = vrcp.pop 32.0
  %v37 = vmul.f32 32.0, %v36
  %v38 = vsub.f32 1.0, %v37
  %v39 = vmul.f32 %v36, %v38
  %v40 = vadd.f32 %v36, %v39
  %vm41 = vweird.f32 %v36
  %v42 = vsel %vm41, %v36, %v40
  %v43 = vmul.f32 %v32, %v42
  %v44 = vmul.f32 %v35, %v42
  %v45 = vsub.f32 %v25, %v43
  %v46 = vsub.f32 %v26, %v44
  %v47 = vmul.f32 %v45, %v45
  %v48 = vmul.f32 %v46, %v46
  %v49 = vsel %vm29, %v47, 0.0
  %50 = vadd.xlane.f32.xlu0 %v49
  %v51 = vpop.xlane.xlu0 %50
  %v52 = vsel %vm29, %v48, 0.0
  %53 = vadd.xlane.f32.xlu0 %v52
  %v54 = vpop.xlane.xlu0 %53
  %v55 = vmul.f32 %v51, %v42
  %v56 = vmul.f32 %v54, %v42
  %v57 = vadd.f32 %v55, 1e-12
  %v58 = vadd.f32 %v56, 1e-12
  %v59 = vrsqrt.pop %v57
  %v60 = vmul.f32 %v59, %v57
  %v61 = vmul.f32 %v60, %v59
  %v62 = vmul.f32 0.5, %v61
  %v63 = vsub.f32 1.5, %v62
  %v64 = vmul.f32 %v59, %v63
  %vm65 = vweird.f32 %v57
  %vm66 = vweird.f32 %v59
  %vm67 = vmor %vm65, %vm66
  %v68 = vsel %vm67, %v59, %v64
  %v69 = vrsqrt.pop %v58
  %v70 = vmul.f32 %v69, %v58
  %v71 = vmul.f32 %v70, %v69
  %v72 = vmul.f32 0.5, %v71
  %v73 = vsub.f32 1.5, %v72
  %v74 = vmul.f32 %v69, %v73
  %vm75 = vweird.f32 %v58
  %vm76 = vweird.f32 %v69
  %vm77 = vmor %vm75, %vm76
  %v78 = vsel %vm77, %v69, %v74
  %v79 = vmul.f32 %v45, %v68
  %v80 = vmul.f32 %v46, %v78
  %v82 = vperm.slane %v27, 0
  %v84 = vmul.f32 %v79, %v82
  %v85 = vmul.f32 %v80, %v82
  %v87 = vperm.slane %v28, 0
  %v89 = vadd.f32 %v84, %v87
  %v90 = vadd.f32 %v85, %v87
  %v91 = vpack.c.bf16 %v89, %v89
  %v92 = vpack.c.bf16 %v90, %v90
  %vm93 = vcmask 257024
  %94 = vst.msk [vmem:[%s4] sm:$0xf] %vm93, %v91
  %95 = vst.msk [vmem:[%s4 + $0x4] sm:$0xf] %vm93, %v92
  // Predicated region
  $region18: #{_lambda_.20} parent=0 // pred_check
    _
  $region19: #{_lambda_.20} parent=0 // pred_check_branch
    %97 = sbr.rel (0) target = $region21
  $region20: #{_lambda_.20} parent=0 // pred_region
    _
  $region21: #{_lambda_.20} parent=0 // pred_fallthru
    _
  // Predicated region
  $region22: #{_lambda_.20} parent=0 // pred_check
    _
  $region23: #{_lambda_.20} parent=0 // pred_check_branch
    %99 = sbr.rel (0) target = $region25
  $region24: #{_lambda_.20} parent=0 // pred_region
    _
  $region25: #{_lambda_.20} parent=0 // pred_fallthru
    _

// kernel: _lambda_.31
$region0: #{_lambda_.31}
  #allocation0 [shape = 'u32[]', space=smem, size = 0x4, offset = 0x4, fixed_abs, tag = 'smem constant byte address 0x4 - core index']
  #allocation1 [shape = 'u32[72,128]{1,0:T(1,128)}', space=vmem, size = 0x9000, scoped, tag = 'internal scratch']
  #allocation2 [shape = 'f32[2,32]{1,0:T(2,128)}', space=vmem, size = 0x400, scoped, tag = 'scratch operand']
  %s0 = inlined_call_operand.vmem [shape: bf16[2,32], index: 0, kind: input, shape index: {}]
  %s1 = inlined_call_operand.vmem [shape: bf16[32,32], index: 1, kind: input, shape index: {}]
  %s2 = inlined_call_operand.vmem [shape: f32[1,32], index: 2, kind: input, shape index: {}]
  %s3 = inlined_call_operand.hbm [shape: f32[2,32], index: 3, kind: output, shape index: {}]
  %s4 = sld [smem:[#allocation0]]
  $region30: #{_lambda_.31} parent=0
    _
  %s6 = ssub.s32 1, %s4
  %s7 = scalar_select 0, %s6, %s4
  $region1: #{_lambda_.31} parent=0
    #allocation3 [shape = 'u8[1024]{0}', space=vmem, size = 0x400, scoped, tag = 'output window, operand 0, single buffered']
    #allocation4 [shape = 's32[1]{0}', space=sflag, size = 0x4, scoped, tag = 'scoped memory for _lambda_.31']
    %8 = vsyncpa [#allocation4], 0
    // Predicated region
    $region2: #{_lambda_.31} parent=1 // pred_check
      _
    $region3: #{_lambda_.31} parent=1 // pred_check_branch
      %10 = sbr.rel (0) target = $region5
    $region4: #{_lambda_.31} parent=1 // pred_region
      _
    $region5: #{_lambda_.31} parent=1 // pred_fallthru
      _
    // Predicated region
    $region6: #{_lambda_.31} parent=1 // pred_check
      _
    $region7: #{_lambda_.31} parent=1 // pred_check_branch
      %12 = sbr.rel (0) target = $region9
    $region8: #{_lambda_.31} parent=1 // pred_region
      _
    $region9: #{_lambda_.31} parent=1 // pred_fallthru
      _
    // Predicated region
    $region10: #{_lambda_.31} parent=1 // pred_check
      _
    $region11: #{_lambda_.31} parent=1 // pred_check_branch
      %14 = sbr.rel (0) target = $region13
    $region12: #{_lambda_.31} parent=1 // pred_region
      _
    $region13: #{_lambda_.31} parent=1 // pred_fallthru
      _
    %p16 = scmp.eq.s32.totalorder 0, 0
    // Predicated region
    $region14: #{_lambda_.31} parent=1 // pred_check
      %p17 = pneg %p16
    $region15: #{_lambda_.31} parent=1 // pred_check_branch
      %19 = sbr.rel (%p17) target = $region17
    $region16: #{_lambda_.31} parent=1 // pred_region
      %vm20 = vcmask 254976
      %21 = vst.msk [vmem:[#allocation2] sm:$0x3] %vm20, 0.0
    $region17: #{_lambda_.31} parent=1 // pred_fallthru
      _
    %v22 = vld [vmem:[#allocation2] sm:$0x3]
    %v23 = vld [vmem:[%s0] sm:$0x1]
    %v24 = vld [vmem:[%s1] sm:$0xf]
    %v25 = vld [vmem:[%s1 + $0x4] sm:$0xf]
    %v26 = vld [vmem:[%s1 + $0x8] sm:$0xf]
    %v27 = vld [vmem:[%s1 + $0xc] sm:$0xf]
    %v32 = vunpack.c.l.b16 %v24
    %v33 = vunpack.c.l.b16 %v25
    %v34 = vunpack.c.l.b16 %v26
    %v35 = vunpack.c.l.b16 %v27
    %v36 = vpack.c.b16 %v33, %v32
    %v37 = vpack.c.b16 %v35, %v34
    %vm40 = vcmask 261120
    %v42 = vsel %vm40, %v23, 0
    %44 = vmatpush.bf16.msra.mxu0 0
    %45 = vmatpush.bf16.msra.mxu0 0
    %46 = vmatpush.bf16.msra.mxu0 0
    %47 = vmatpush.bf16.msra.mxu0 0
    %48 = vmatpush.bf16.msra.mxu0 0
    %49 = vmatpush.bf16.msra.mxu0 0
    %50 = vmatpush.bf16.msra.mxu0 %v37
    %51 = vmatpush.bf16.msra.mxu0 %v36
    %52 = vmatmul.bf16.gmra.mxu0 %v42
    %v53 = vpop.f32.mrf.mxu0
    %v54 = vadd.f32 0.0, %v53
    %v55 = vpop.f32.mrf.mxu0
    %56 = vdwg.mxu0
    %v57 = vadd.f32 %v22, %v54
    %vm58 = vcmask 254976
    %59 = vst.msk [vmem:[#allocation2] sm:$0x3] %vm58, %v57
    // Predicated region
    $region18: #{_lambda_.31} parent=1 // pred_check
      %p60 = pneg %p16
    $region19: #{_lambda_.31} parent=1 // pred_check_branch
      %62 = sbr.rel (%p60) target = $region21
    $region20: #{_lambda_.31} parent=1 // pred_region
      %v63 = vld [vmem:[#allocation2] sm:$0x3]
      %v64 = vld [vmem:[%s2] sm:$0x1]
      %v66 = vperm.slane %v64, 0
      %v68 = vadd.f32 %v63, %v66
      %v69 = vtanh.pop %v68
      %70 = vst.msk [vmem:[#allocation3] sm:$0x3] %vm58, %v69
    $region21: #{_lambda_.31} parent=1 // pred_fallthru
      _
    // Predicated region
    $region22: #{_lambda_.31} parent=1 // pred_check
      _
    $region23: #{_lambda_.31} parent=1 // pred_check_branch
      %72 = sbr.rel (0) target = $region25
    $region24: #{_lambda_.31} parent=1 // pred_region
      %74 = vsyncadd [#allocation4], 0
      %s76 = sshll.u32 [#allocation3], 4
      %s77 = int_to_ptr.vmem [resolvable:$true] %s76
      %s78 = sshll.u32 %s3, 4
      %s79 = int_to_ptr.hbm [resolvable:$true] %s78
      %81 = dma.vmem_to_hbm [thread:$0]  %s77, 32, %s79, [#allocation4]
    $region25: #{_lambda_.31} parent=1 // pred_fallthru
      _
    // Predicated region
    $region26: #{_lambda_.31} parent=1 // pred_check
      _
    $region27: #{_lambda_.31} parent=1 // pred_check_branch
      %83 = sbr.rel (0) target = $region29
    $region28: #{_lambda_.31} parent=1 // pred_region
      %85 = dma.done [#allocation4], 32
    $region29: #{_lambda_.31} parent=1 // pred_fallthru
      _
    %86 = vsyncpa [#allocation4], 1

</llo_original>
